<compile_context>
chip_gen: v6e
topology: v6e:2x2x1
jax: 0.10.0
libtpu: 0.0.40
codegen_flags: <defaults>
</compile_context>

<pallas_src>
import functools

import jax
import jax.numpy as jnp
from jax import lax
from jax.experimental import pallas as pl
from jax.experimental.pallas import tpu as pltpu


def _cdiv(a, b):
    return -(-a // b)


def _round_up(a, b):
    return _cdiv(a, b) * b


def _rnn_kernel(x_ref, wxh_ref, whh_ref, b_ref, h0_ref, out_ref,
                h_scratch, xp_scratch, *, batch, unroll):
    """One grid step == one chunk of time steps.

    Phase 0: hoisted input projection for the whole chunk (one MXU matmul).
    Phase 1: serial recurrence h_t = tanh(Xp[t] + h_{t-1} @ W_hh) via a
             partially-unrolled fori_loop, writing hiddens into the resident
             lane-dense output slab (one big HBM writeback per chunk).
    """
    c = pl.program_id(0)
    chunk_rows = x_ref.shape[0]          # TC * Bp rows in this chunk (static)
    steps = chunk_rows // batch          # TC (static)

    # Initialize the recurrent state from H0 on the first chunk only.
    @pl.when(c == 0)
    def _():
        h_scratch[...] = h0_ref[...]

    # ---- Phase 0: time-independent projection, lifted out of the recurrence.
    # (TC*Bp, D) @ (D, Hp) in one MXU call; bias folded in (f32 accumulation).
    xp_scratch[...] = (
        jnp.dot(x_ref[...], wxh_ref[...], preferred_element_type=jnp.float32)
        + b_ref[...])                                   # (TC*Bp, Hp) f32

    # ---- Phase 1: serial recurrence over the chunk.
    # NOTE: the remaining per-step critical path is the small (Bp,Hp)x(Hp,Hp)
    # matmul.  Keeping W_hh stationary in the MXU (pltpu.matmul_push_rhs once
    # per chunk + matmul_acc_lhs/matmul_pop per step) would remove the weight
    # reload from every step, but the accumulator/pop reset semantics differ
    # between MRF (v5e/v6e) and MRB (v7x), so we keep the portable jnp.dot.
    whh = whh_ref[...]

    def step(t, h):
        base = pl.multiple_of(t * batch, batch)         # sublane-aligned slice
        z = (xp_scratch[pl.ds(base, batch), :]
             + jnp.dot(h.astype(whh.dtype), whh,
                       preferred_element_type=jnp.float32))
        h_new = jnp.tanh(z)
        out_ref[t] = h_new.astype(out_ref.dtype)        # VMEM store (lane-dense)
        return h_new

    h_last = lax.fori_loop(0, steps, step, h_scratch[...], unroll=unroll)
    h_scratch[...] = h_last                             # carry to next chunk


def rnn_forward(inputs, w_xh, w_hh, b, H=None, *,
                compute_dtype=jnp.float32, time_chunk=None,
                vmem_budget_bytes=40 * 1024 * 1024):
    """inputs: (T, B, D); w_xh: (D, H); w_hh: (H, H); b: (1, H) or (H,).
    Returns (outputs (T, B, H), h_n (1, B, H)) -- same semantics as nn.RNN.

    compute_dtype=jnp.bfloat16 feeds the MXU bf16 inputs with f32 accumulation
    and an f32 recurrent state -- recommended on ALL TPU generations (on v5e
    the f32 matmul path is multi-pass emulation).  The per-step hidden state is
    down-cast to bf16 before the W_hh matmul, so rounding error compounds with
    sequence length; keep float32 if that matters.
    """
    T, B, D = inputs.shape
    Hn = w_xh.shape[1]
    assert T >= 1, "empty sequence not supported"
    out_dtype = inputs.dtype

    # ---- Wrapper-side padding to hardware tiles -----------------------------
    # Bp: multiple of the f32 sublane tile so per-step (Bp, Hp) slices of the
    #     projection scratch never straddle (8,128) tiles.
    # Hp: multiple of the 128-lane tile so stores / writeback are lane-dense.
    Bp = _round_up(B, 8)
    Hp = _round_up(Hn, 128)

    csize = jnp.dtype(compute_dtype).itemsize
    osize = jnp.dtype(out_dtype).itemsize

    # ---- VMEM-budget-derived time chunk -------------------------------------
    # Resident bytes per time step: double-buffered X chunk + double-buffered
    # output chunk + f32 projection scratch.
    per_step = Bp * D * csize * 2 + Bp * Hp * osize * 2 + Bp * Hp * 4
    # Constant operands (conservatively assume double-buffered) + h scratch.
    const_bytes = (D * Hp + Hp * Hp) * csize + Hp * 4 + Bp * Hp * 4
    fixed = 2 * const_bytes + Bp * Hp * 4
    avail = max(vmem_budget_bytes - fixed, per_step)
    tc_cap = max(int(avail // per_step), 1)

    target = 256 if time_chunk is None else time_chunk
    tc_target = max(1, min(target, tc_cap, T))
    # Zero-pad T up to a multiple of the chunk instead of searching for a
    # divisor (prime / awkward T previously degenerated to tc = 1).
    nc = _cdiv(T, tc_target)
    tc = _cdiv(T, nc)
    T_pad = nc * tc

    resident = fixed + per_step * tc
    vmem_limit = int(min(96 * 2**20, max(32 * 2**20, resident * 5 // 4)))

    # ---- Pad + cast operands (zero padding => padded lanes stay exactly 0) ---
    x = inputs
    if T_pad != T or Bp != B:
        x = jnp.pad(x, ((0, T_pad - T), (0, Bp - B), (0, 0)))
    x2d = x.reshape(T_pad * Bp, D).astype(compute_dtype)   # cast in wrapper

    wxh = jnp.pad(w_xh, ((0, 0), (0, Hp - Hn))).astype(compute_dtype)
    whh = jnp.pad(w_hh, ((0, Hp - Hn), (0, Hp - Hn))).astype(compute_dtype)
    b_f32 = jnp.pad(b.reshape(1, Hn).astype(jnp.float32), ((0, 0), (0, Hp - Hn)))
    if H is None:
        h0 = jnp.zeros((Bp, Hp), jnp.float32)
    else:
        h0 = jnp.pad(H.reshape(B, Hn).astype(jnp.float32),
                     ((0, Bp - B), (0, Hp - Hn)))

    kernel = functools.partial(_rnn_kernel, batch=Bp, unroll=min(tc, 8))

    # Advisory cost hint so XLA schedules surrounding ops around this long,
    # sequential kernel instead of serializing on it.
    cost = pl.CostEstimate(
        flops=2 * T_pad * Bp * (D + Hp) * Hp,
        transcendentals=T_pad * Bp * Hp,
        bytes_accessed=(x2d.size * csize + T_pad * Bp * Hp * osize
                        + (D * Hp + Hp * Hp) * csize + (Hp + Bp * Hp) * 4),
    )

    def _const_spec(shape, single_buffer):
        # Constant-index operands (weights / bias / H0): single buffering frees
        # VMEM (double buffering buys nothing when the block never changes).
        if single_buffer:
            return pl.BlockSpec(shape, lambda c: (0,) * len(shape),
                                pipeline_mode=pl.Buffered(1))
        return pl.BlockSpec(shape, lambda c: (0,) * len(shape))

    def _make_call(single_buffer_consts):
        grid_spec = pltpu.PrefetchScalarGridSpec(
            num_scalar_prefetch=0,
            grid=(nc,),
            in_specs=[
                pl.BlockSpec((tc * Bp, D), lambda c: (c, 0)),   # X chunk
                _const_spec((D, Hp), single_buffer_consts),     # W_xh
                _const_spec((Hp, Hp), single_buffer_consts),    # W_hh
                _const_spec((1, Hp), single_buffer_consts),     # bias
                _const_spec((Bp, Hp), single_buffer_consts),    # H0
            ],
            out_specs=pl.BlockSpec((tc, Bp, Hp), lambda c: (c, 0, 0)),
            scratch_shapes=[
                pltpu.VMEM((Bp, Hp), jnp.float32),        # recurrent state
                pltpu.VMEM((tc * Bp, Hp), jnp.float32),   # hoisted projection
            ],
        )
        # NOTE(v7x): for large B, a leading size-2 "parallel" grid axis that
        # splits the batch across the two TensorCores (per-core h scratch)
        # would ~2x the HBM-bound phases; not useful at B=8.
        return pl.pallas_call(
            kernel,
            out_shape=jax.ShapeDtypeStruct((T_pad, Bp, Hp), out_dtype),
            grid_spec=grid_spec,
            compiler_params=pltpu.CompilerParams(
                dimension_semantics=("arbitrary",),   # true time recurrence
                vmem_limit_bytes=vmem_limit,
            ),
            cost_estimate=cost,
        )

    try:
        outputs_p = _make_call(True)(x2d, wxh, whh, b_f32, h0)
    except Exception:
        # Some Pallas builds reject pipeline_mode on top-level pallas_call
        # BlockSpecs; fall back to default (double) buffering.
        outputs_p = _make_call(False)(x2d, wxh, whh, b_f32, h0)

    outputs = outputs_p[:T, :B, :Hn]
    h_n = outputs[T - 1][None]          # output at each step == hidden state
    return outputs, h_n


def _reference(inputs, w_xh, w_hh, b, h0):
    """Pure-JAX reference (lax.scan) for correctness check."""
    def step(h, x):
        h_new = jnp.tanh(x @ w_xh + h @ w_hh + b)
        return h_new, h_new
    h_last, outs = jax.lax.scan(step, h0, inputs)
    return outs, h_last[None]


if __name__ == "__main__":
    # Small shapes consistent with the module: seq=8, batch=8, inputs=32, hiddens=32.
    T, B, D, Hn = 8, 8, 32, 32
    key = jax.random.PRNGKey(0)
    k_x, k_wxh, k_whh, k_bih, k_bhh, k_h0 = jax.random.split(key, 6)

    scale = 1.0 / jnp.sqrt(jnp.float32(Hn))  # PyTorch nn.RNN init range
    x = jax.random.normal(k_x, (T, B, D), dtype=jnp.float32)
    # nn.RNN stores weight_ih (H, D), weight_hh (H, H); we keep them pre-transposed.
    w_xh = jax.random.uniform(k_wxh, (D, Hn), minval=-scale, maxval=scale, dtype=jnp.float32)
    w_hh = jax.random.uniform(k_whh, (Hn, Hn), minval=-scale, maxval=scale, dtype=jnp.float32)
    b_ih = jax.random.uniform(k_bih, (Hn,), minval=-scale, maxval=scale, dtype=jnp.float32)
    b_hh = jax.random.uniform(k_bhh, (Hn,), minval=-scale, maxval=scale, dtype=jnp.float32)
    b = (b_ih + b_hh).reshape(1, Hn)

    # ---- f32 path, H=None (zero initial state), matches nn.RNN semantics ----
    outputs, h_n = rnn_forward(x, w_xh, w_hh, b, H=None)
    outputs = jax.block_until_ready(outputs)
    h_n = jax.block_until_ready(h_n)

    ref_out, ref_hn = _reference(x, w_xh, w_hh, b, jnp.zeros((B, Hn), jnp.float32))
    assert outputs.shape == (T, B, Hn) and h_n.shape == (1, B, Hn)
    assert jnp.allclose(outputs, ref_out, atol=1e-5, rtol=1e-5)
    assert jnp.allclose(h_n, ref_hn, atol=1e-5, rtol=1e-5)

    # ---- f32 path with an explicit initial hidden state ----
    h0 = 0.1 * jax.random.normal(k_h0, (1, B, Hn), dtype=jnp.float32)
    out2, hn2 = rnn_forward(x, w_xh, w_hh, b, H=h0)
    out2 = jax.block_until_ready(out2)
    ref_out2, ref_hn2 = _reference(x, w_xh, w_hh, b, h0.reshape(B, Hn))
    assert jnp.allclose(out2, ref_out2, atol=1e-5, rtol=1e-5)
    assert jnp.allclose(hn2, ref_hn2, atol=1e-5, rtol=1e-5)

    # ---- awkward T + small chunk: exercises T-padding and multi-chunk carry ----
    T2 = 7
    x7 = x[:T2]
    out7, hn7 = rnn_forward(x7, w_xh, w_hh, b, H=None, time_chunk=4)
    out7 = jax.block_until_ready(out7)
    ref_out7, ref_hn7 = _reference(x7, w_xh, w_hh, b, jnp.zeros((B, Hn), jnp.float32))
    assert out7.shape == (T2, B, Hn) and hn7.shape == (1, B, Hn)
    assert jnp.allclose(out7, ref_out7, atol=1e-5, rtol=1e-5)
    assert jnp.allclose(hn7, ref_hn7, atol=1e-5, rtol=1e-5)

    # ---- bf16-fed MXU path (recommended on v5e/v6e/v7x): f32 accumulation ----
    out_bf16, hn_bf16 = rnn_forward(x, w_xh, w_hh, b, H=None,
                                    compute_dtype=jnp.bfloat16)
    out_bf16 = jax.block_until_ready(out_bf16)
    assert jnp.allclose(out_bf16, ref_out, atol=5e-2, rtol=5e-2)
    assert jnp.allclose(hn_bf16, ref_hn, atol=5e-2, rtol=5e-2)

    print("KERNEL_OK")
</pallas_src>

<mosaic_0001>
module attributes {stable_mosaic.version = 11 : i64} {
  func.func @_rnn_kernel(%arg0: i32, %arg1: memref<64x32xf32, #tpu.memory_space<vmem>>, %arg2: memref<32x128xf32, #tpu.memory_space<vmem>>, %arg3: memref<128x128xf32, #tpu.memory_space<vmem>>, %arg4: memref<1x128xf32, #tpu.memory_space<vmem>>, %arg5: memref<8x128xf32, #tpu.memory_space<vmem>>, %arg6: memref<8x8x128xf32, #tpu.memory_space<vmem>>, %arg7: memref<8x128xf32, #tpu.memory_space<vmem>>, %arg8: memref<64x128xf32, #tpu.memory_space<vmem>>) attributes {dimension_semantics = [#tpu.dimension_semantics<arbitrary>], iteration_bounds = array<i64: 1>, scalar_prefetch = 0 : i64, scratch_operands = 2 : i64, tpu.core_type = #tpu.core_type<tc>, window_params = [{transform_indices = @transform_0, window_bounds = array<i64: 64, 32>}, {pipeline_mode = #tpu.pipeline_mode<synchronous>, transform_indices = @transform_1, window_bounds = array<i64: 32, 128>}, {pipeline_mode = #tpu.pipeline_mode<synchronous>, transform_indices = @transform_2, window_bounds = array<i64: 128, 128>}, {pipeline_mode = #tpu.pipeline_mode<synchronous>, transform_indices = @transform_3, window_bounds = array<i64: 1, 128>}, {pipeline_mode = #tpu.pipeline_mode<synchronous>, transform_indices = @transform_4, window_bounds = array<i64: 8, 128>}, {transform_indices = @transform_5, window_bounds = array<i64: 8, 8, 128>}]} {
    %c0_i32 = arith.constant 0 : i32
    %0 = arith.cmpi eq, %arg0, %c0_i32 : i32
    %1 = arith.extui %0 : i1 to i32
    %c0_i32_0 = arith.constant 0 : i32
    %2 = arith.cmpi ne, %1, %c0_i32_0 : i32
    scf.if %2 {
      %c0_55 = arith.constant 0 : index
      %c0_56 = arith.constant 0 : index
      %101 = vector.load %arg5[%c0_55, %c0_56] : memref<8x128xf32, #tpu.memory_space<vmem>>, vector<8x128xf32>
      %c0_57 = arith.constant 0 : index
      %c0_58 = arith.constant 0 : index
      %102 = vector.load %arg7[%c0_57, %c0_58] : memref<8x128xf32, #tpu.memory_space<vmem>>, vector<8x128xf32>
      tpu.vector_store %arg7[%c0_57, %c0_58], %101 {strides = array<i32>} : memref<8x128xf32, #tpu.memory_space<vmem>>, vector<8x128xf32>,
    } else {
    }
    %c0 = arith.constant 0 : index
    %c0_1 = arith.constant 0 : index
    %3 = vector.load %arg1[%c0, %c0_1] : memref<64x32xf32, #tpu.memory_space<vmem>>, vector<64x32xf32>
    %c0_2 = arith.constant 0 : index
    %c0_3 = arith.constant 0 : index
    %4 = vector.load %arg2[%c0_2, %c0_3] : memref<32x128xf32, #tpu.memory_space<vmem>>, vector<32x128xf32>
    %cst = arith.constant dense<0.000000e+00> : vector<64x128xf32>
    %5 = tpu.matmul %3, %4, %cst {dimension_numbers = #tpu.dot_dimension_numbers<[1], [0], [0], [1], [0, 0, 1, 1], [], []>} : vector<64x32xf32>, vector<32x128xf32>, vector<64x128xf32> -> vector<64x128xf32>
    %c0_4 = arith.constant 0 : index
    %c0_5 = arith.constant 0 : index
    %6 = vector.load %arg4[%c0_4, %c0_5] : memref<1x128xf32, #tpu.memory_space<vmem>>, vector<1x128xf32>
    %7 = vector.broadcast %6 : vector<1x128xf32> to vector<64x128xf32>
    %8 = arith.addf %5, %7 : vector<64x128xf32>
    %c0_6 = arith.constant 0 : index
    %c0_7 = arith.constant 0 : index
    %9 = vector.load %arg8[%c0_6, %c0_7] : memref<64x128xf32, #tpu.memory_space<vmem>>, vector<64x128xf32>
    tpu.vector_store %arg8[%c0_6, %c0_7], %8 {strides = array<i32>} : memref<64x128xf32, #tpu.memory_space<vmem>>, vector<64x128xf32>,
    %c0_8 = arith.constant 0 : index
    %c0_9 = arith.constant 0 : index
    %10 = vector.load %arg3[%c0_8, %c0_9] : memref<128x128xf32, #tpu.memory_space<vmem>>, vector<128x128xf32>
    %c0_10 = arith.constant 0 : index
    %c0_11 = arith.constant 0 : index
    %11 = vector.load %arg7[%c0_10, %c0_11] : memref<8x128xf32, #tpu.memory_space<vmem>>, vector<8x128xf32>
    %c0_i32_12 = arith.constant 0 : i32
    %c8_i32 = arith.constant 8 : i32
    %12 = arith.muli %c0_i32_12, %c8_i32 : i32
    %13 = tpu.assume_multiple %12, 8 : i32
    %14 = arith.index_cast %13 : i32 to index
    %c0_13 = arith.constant 0 : index
    %15 = vector.load %arg8[%14, %c0_13] : memref<64x128xf32, #tpu.memory_space<vmem>>, vector<8x128xf32>
    %cst_14 = arith.constant dense<0.000000e+00> : vector<8x128xf32>
    %16 = tpu.matmul %11, %10, %cst_14 {dimension_numbers = #tpu.dot_dimension_numbers<[1], [0], [0], [1], [0, 0, 1, 1], [], []>} : vector<8x128xf32>, vector<128x128xf32>, vector<8x128xf32> -> vector<8x128xf32>
    %17 = arith.addf %15, %16 : vector<8x128xf32>
    %18 = math.tanh %17 : vector<8x128xf32>
    %19 = arith.index_cast %c0_i32_12 : i32 to index
    %c0_15 = arith.constant 0 : index
    %c0_16 = arith.constant 0 : index
    %20 = vector.load %arg6[%19, %c0_15, %c0_16] : memref<8x8x128xf32, #tpu.memory_space<vmem>>, vector<1x8x128xf32>
    %21 = vector.shape_cast %20 : vector<1x8x128xf32> to vector<8x128xf32>
    %22 = vector.shape_cast %18 : vector<8x128xf32> to vector<1x8x128xf32>
    tpu.vector_store %arg6[%19, %c0_15, %c0_16], %22 {strides = array<i32>} : memref<8x8x128xf32, #tpu.memory_space<vmem>>, vector<1x8x128xf32>,
    %c1_i32 = arith.constant 1 : i32
    %c8_i32_17 = arith.constant 8 : i32
    %23 = arith.muli %c1_i32, %c8_i32_17 : i32
    %24 = tpu.assume_multiple %23, 8 : i32
    %25 = arith.index_cast %24 : i32 to index
    %c0_18 = arith.constant 0 : index
    %26 = vector.load %arg8[%25, %c0_18] : memref<64x128xf32, #tpu.memory_space<vmem>>, vector<8x128xf32>
    %cst_19 = arith.constant dense<0.000000e+00> : vector<8x128xf32>
    %27 = tpu.matmul %18, %10, %cst_19 {dimension_numbers = #tpu.dot_dimension_numbers<[1], [0], [0], [1], [0, 0, 1, 1], [], []>} : vector<8x128xf32>, vector<128x128xf32>, vector<8x128xf32> -> vector<8x128xf32>
    %28 = arith.addf %26, %27 : vector<8x128xf32>
    %29 = math.tanh %28 : vector<8x128xf32>
    %30 = arith.index_cast %c1_i32 : i32 to index
    %c0_20 = arith.constant 0 : index
    %c0_21 = arith.constant 0 : index
    %31 = vector.load %arg6[%30, %c0_20, %c0_21] : memref<8x8x128xf32, #tpu.memory_space<vmem>>, vector<1x8x128xf32>
    %32 = vector.shape_cast %31 : vector<1x8x128xf32> to vector<8x128xf32>
    %33 = vector.shape_cast %29 : vector<8x128xf32> to vector<1x8x128xf32>
    tpu.vector_store %arg6[%30, %c0_20, %c0_21], %33 {strides = array<i32>} : memref<8x8x128xf32, #tpu.memory_space<vmem>>, vector<1x8x128xf32>,
    %c2_i32 = arith.constant 2 : i32
    %c8_i32_22 = arith.constant 8 : i32
    %34 = arith.muli %c2_i32, %c8_i32_22 : i32
    %35 = tpu.assume_multiple %34, 8 : i32
    %36 = arith.index_cast %35 : i32 to index
    %c0_23 = arith.constant 0 : index
    %37 = vector.load %arg8[%36, %c0_23] : memref<64x128xf32, #tpu.memory_space<vmem>>, vector<8x128xf32>
    %cst_24 = arith.constant dense<0.000000e+00> : vector<8x128xf32>
    %38 = tpu.matmul %29, %10, %cst_24 {dimension_numbers = #tpu.dot_dimension_numbers<[1], [0], [0], [1], [0, 0, 1, 1], [], []>} : vector<8x128xf32>, vector<128x128xf32>, vector<8x128xf32> -> vector<8x128xf32>
    %39 = arith.addf %37, %38 : vector<8x128xf32>
    %40 = math.tanh %39 : vector<8x128xf32>
    %41 = arith.index_cast %c2_i32 : i32 to index
    %c0_25 = arith.constant 0 : index
    %c0_26 = arith.constant 0 : index
    %42 = vector.load %arg6[%41, %c0_25, %c0_26] : memref<8x8x128xf32, #tpu.memory_space<vmem>>, vector<1x8x128xf32>
    %43 = vector.shape_cast %42 : vector<1x8x128xf32> to vector<8x128xf32>
    %44 = vector.shape_cast %40 : vector<8x128xf32> to vector<1x8x128xf32>
    tpu.vector_store %arg6[%41, %c0_25, %c0_26], %44 {strides = array<i32>} : memref<8x8x128xf32, #tpu.memory_space<vmem>>, vector<1x8x128xf32>,
    %c3_i32 = arith.constant 3 : i32
    %c8_i32_27 = arith.constant 8 : i32
    %45 = arith.muli %c3_i32, %c8_i32_27 : i32
    %46 = tpu.assume_multiple %45, 8 : i32
    %47 = arith.index_cast %46 : i32 to index
    %c0_28 = arith.constant 0 : index
    %48 = vector.load %arg8[%47, %c0_28] : memref<64x128xf32, #tpu.memory_space<vmem>>, vector<8x128xf32>
    %cst_29 = arith.constant dense<0.000000e+00> : vector<8x128xf32>
    %49 = tpu.matmul %40, %10, %cst_29 {dimension_numbers = #tpu.dot_dimension_numbers<[1], [0], [0], [1], [0, 0, 1, 1], [], []>} : vector<8x128xf32>, vector<128x128xf32>, vector<8x128xf32> -> vector<8x128xf32>
    %50 = arith.addf %48, %49 : vector<8x128xf32>
    %51 = math.tanh %50 : vector<8x128xf32>
    %52 = arith.index_cast %c3_i32 : i32 to index
    %c0_30 = arith.constant 0 : index
    %c0_31 = arith.constant 0 : index
    %53 = vector.load %arg6[%52, %c0_30, %c0_31] : memref<8x8x128xf32, #tpu.memory_space<vmem>>, vector<1x8x128xf32>
    %54 = vector.shape_cast %53 : vector<1x8x128xf32> to vector<8x128xf32>
    %55 = vector.shape_cast %51 : vector<8x128xf32> to vector<1x8x128xf32>
    tpu.vector_store %arg6[%52, %c0_30, %c0_31], %55 {strides = array<i32>} : memref<8x8x128xf32, #tpu.memory_space<vmem>>, vector<1x8x128xf32>,
    %c4_i32 = arith.constant 4 : i32
    %c8_i32_32 = arith.constant 8 : i32
    %56 = arith.muli %c4_i32, %c8_i32_32 : i32
    %57 = tpu.assume_multiple %56, 8 : i32
    %58 = arith.index_cast %57 : i32 to index
    %c0_33 = arith.constant 0 : index
    %59 = vector.load %arg8[%58, %c0_33] : memref<64x128xf32, #tpu.memory_space<vmem>>, vector<8x128xf32>
    %cst_34 = arith.constant dense<0.000000e+00> : vector<8x128xf32>
    %60 = tpu.matmul %51, %10, %cst_34 {dimension_numbers = #tpu.dot_dimension_numbers<[1], [0], [0], [1], [0, 0, 1, 1], [], []>} : vector<8x128xf32>, vector<128x128xf32>, vector<8x128xf32> -> vector<8x128xf32>
    %61 = arith.addf %59, %60 : vector<8x128xf32>
    %62 = math.tanh %61 : vector<8x128xf32>
    %63 = arith.index_cast %c4_i32 : i32 to index
    %c0_35 = arith.constant 0 : index
    %c0_36 = arith.constant 0 : index
    %64 = vector.load %arg6[%63, %c0_35, %c0_36] : memref<8x8x128xf32, #tpu.memory_space<vmem>>, vector<1x8x128xf32>
    %65 = vector.shape_cast %64 : vector<1x8x128xf32> to vector<8x128xf32>
    %66 = vector.shape_cast %62 : vector<8x128xf32> to vector<1x8x128xf32>
    tpu.vector_store %arg6[%63, %c0_35, %c0_36], %66 {strides = array<i32>} : memref<8x8x128xf32, #tpu.memory_space<vmem>>, vector<1x8x128xf32>,
    %c5_i32 = arith.constant 5 : i32
    %c8_i32_37 = arith.constant 8 : i32
    %67 = arith.muli %c5_i32, %c8_i32_37 : i32
    %68 = tpu.assume_multiple %67, 8 : i32
    %69 = arith.index_cast %68 : i32 to index
    %c0_38 = arith.constant 0 : index
    %70 = vector.load %arg8[%69, %c0_38] : memref<64x128xf32, #tpu.memory_space<vmem>>, vector<8x128xf32>
    %cst_39 = arith.constant dense<0.000000e+00> : vector<8x128xf32>
    %71 = tpu.matmul %62, %10, %cst_39 {dimension_numbers = #tpu.dot_dimension_numbers<[1], [0], [0], [1], [0, 0, 1, 1], [], []>} : vector<8x128xf32>, vector<128x128xf32>, vector<8x128xf32> -> vector<8x128xf32>
    %72 = arith.addf %70, %71 : vector<8x128xf32>
    %73 = math.tanh %72 : vector<8x128xf32>
    %74 = arith.index_cast %c5_i32 : i32 to index
    %c0_40 = arith.constant 0 : index
    %c0_41 = arith.constant 0 : index
    %75 = vector.load %arg6[%74, %c0_40, %c0_41] : memref<8x8x128xf32, #tpu.memory_space<vmem>>, vector<1x8x128xf32>
    %76 = vector.shape_cast %75 : vector<1x8x128xf32> to vector<8x128xf32>
    %77 = vector.shape_cast %73 : vector<8x128xf32> to vector<1x8x128xf32>
    tpu.vector_store %arg6[%74, %c0_40, %c0_41], %77 {strides = array<i32>} : memref<8x8x128xf32, #tpu.memory_space<vmem>>, vector<1x8x128xf32>,
    %c6_i32 = arith.constant 6 : i32
    %c8_i32_42 = arith.constant 8 : i32
    %78 = arith.muli %c6_i32, %c8_i32_42 : i32
    %79 = tpu.assume_multiple %78, 8 : i32
    %80 = arith.index_cast %79 : i32 to index
    %c0_43 = arith.constant 0 : index
    %81 = vector.load %arg8[%80, %c0_43] : memref<64x128xf32, #tpu.memory_space<vmem>>, vector<8x128xf32>
    %cst_44 = arith.constant dense<0.000000e+00> : vector<8x128xf32>
    %82 = tpu.matmul %73, %10, %cst_44 {dimension_numbers = #tpu.dot_dimension_numbers<[1], [0], [0], [1], [0, 0, 1, 1], [], []>} : vector<8x128xf32>, vector<128x128xf32>, vector<8x128xf32> -> vector<8x128xf32>
    %83 = arith.addf %81, %82 : vector<8x128xf32>
    %84 = math.tanh %83 : vector<8x128xf32>
    %85 = arith.index_cast %c6_i32 : i32 to index
    %c0_45 = arith.constant 0 : index
    %c0_46 = arith.constant 0 : index
    %86 = vector.load %arg6[%85, %c0_45, %c0_46] : memref<8x8x128xf32, #tpu.memory_space<vmem>>, vector<1x8x128xf32>
    %87 = vector.shape_cast %86 : vector<1x8x128xf32> to vector<8x128xf32>
    %88 = vector.shape_cast %84 : vector<8x128xf32> to vector<1x8x128xf32>
    tpu.vector_store %arg6[%85, %c0_45, %c0_46], %88 {strides = array<i32>} : memref<8x8x128xf32, #tpu.memory_space<vmem>>, vector<1x8x128xf32>,
    %c7_i32 = arith.constant 7 : i32
    %c8_i32_47 = arith.constant 8 : i32
    %89 = arith.muli %c7_i32, %c8_i32_47 : i32
    %90 = tpu.assume_multiple %89, 8 : i32
    %91 = arith.index_cast %90 : i32 to index
    %c0_48 = arith.constant 0 : index
    %92 = vector.load %arg8[%91, %c0_48] : memref<64x128xf32, #tpu.memory_space<vmem>>, vector<8x128xf32>
    %cst_49 = arith.constant dense<0.000000e+00> : vector<8x128xf32>
    %93 = tpu.matmul %84, %10, %cst_49 {dimension_numbers = #tpu.dot_dimension_numbers<[1], [0], [0], [1], [0, 0, 1, 1], [], []>} : vector<8x128xf32>, vector<128x128xf32>, vector<8x128xf32> -> vector<8x128xf32>
    %94 = arith.addf %92, %93 : vector<8x128xf32>
    %95 = math.tanh %94 : vector<8x128xf32>
    %96 = arith.index_cast %c7_i32 : i32 to index
    %c0_50 = arith.constant 0 : index
    %c0_51 = arith.constant 0 : index
    %97 = vector.load %arg6[%96, %c0_50, %c0_51] : memref<8x8x128xf32, #tpu.memory_space<vmem>>, vector<1x8x128xf32>
    %98 = vector.shape_cast %97 : vector<1x8x128xf32> to vector<8x128xf32>
    %99 = vector.shape_cast %95 : vector<8x128xf32> to vector<1x8x128xf32>
    tpu.vector_store %arg6[%96, %c0_50, %c0_51], %99 {strides = array<i32>} : memref<8x8x128xf32, #tpu.memory_space<vmem>>, vector<1x8x128xf32>,
    %c8_i32_52 = arith.constant 8 : i32
    %c0_53 = arith.constant 0 : index
    %c0_54 = arith.constant 0 : index
    %100 = vector.load %arg7[%c0_53, %c0_54] : memref<8x128xf32, #tpu.memory_space<vmem>>, vector<8x128xf32>
    tpu.vector_store %arg7[%c0_53, %c0_54], %95 {strides = array<i32>} : memref<8x128xf32, #tpu.memory_space<vmem>>, vector<8x128xf32>,
    return
  }
  func.func @transform_0(%arg0: i32) -> (i32, i32) {
    %c0_i32 = arith.constant 0 : i32
    %c0_i32_0 = arith.constant 0 : i32
    return %arg0, %c0_i32 : i32, i32
  }
  func.func @transform_1(%arg0: i32) -> (i32, i32) {
    %c0_i32 = arith.constant 0 : i32
    %c0_i32_0 = arith.constant 0 : i32
    %c0_i32_1 = arith.constant 0 : i32
    return %c0_i32, %c0_i32_0 : i32, i32
  }
  func.func @transform_2(%arg0: i32) -> (i32, i32) {
    %c0_i32 = arith.constant 0 : i32
    %c0_i32_0 = arith.constant 0 : i32
    %c0_i32_1 = arith.constant 0 : i32
    return %c0_i32, %c0_i32_0 : i32, i32
  }
  func.func @transform_3(%arg0: i32) -> (i32, i32) {
    %c0_i32 = arith.constant 0 : i32
    %c0_i32_0 = arith.constant 0 : i32
    %c0_i32_1 = arith.constant 0 : i32
    return %c0_i32, %c0_i32_0 : i32, i32
  }
  func.func @transform_4(%arg0: i32) -> (i32, i32) {
    %c0_i32 = arith.constant 0 : i32
    %c0_i32_0 = arith.constant 0 : i32
    %c0_i32_1 = arith.constant 0 : i32
    return %c0_i32, %c0_i32_0 : i32, i32
  }
  func.func @transform_5(%arg0: i32) -> (i32, i32, i32) {
    %c0_i32 = arith.constant 0 : i32
    %c0_i32_0 = arith.constant 0 : i32
    %c0_i32_1 = arith.constant 0 : i32
    return %arg0, %c0_i32, %c0_i32_0 : i32, i32, i32
  }
}

module attributes {stable_mosaic.version = 11 : i64} {
  func.func @_rnn_kernel(%arg0: i32, %arg1: memref<64x32xf32, #tpu.memory_space<vmem>>, %arg2: memref<32x128xf32, #tpu.memory_space<vmem>>, %arg3: memref<128x128xf32, #tpu.memory_space<vmem>>, %arg4: memref<1x128xf32, #tpu.memory_space<vmem>>, %arg5: memref<8x128xf32, #tpu.memory_space<vmem>>, %arg6: memref<8x8x128xf32, #tpu.memory_space<vmem>>, %arg7: memref<8x128xf32, #tpu.memory_space<vmem>>, %arg8: memref<64x128xf32, #tpu.memory_space<vmem>>) attributes {dimension_semantics = [#tpu.dimension_semantics<arbitrary>], iteration_bounds = array<i64: 1>, scalar_prefetch = 0 : i64, scratch_operands = 2 : i64, tpu.core_type = #tpu.core_type<tc>, window_params = [{transform_indices = @transform_0, window_bounds = array<i64: 64, 32>}, {pipeline_mode = #tpu.pipeline_mode<synchronous>, transform_indices = @transform_1, window_bounds = array<i64: 32, 128>}, {pipeline_mode = #tpu.pipeline_mode<synchronous>, transform_indices = @transform_2, window_bounds = array<i64: 128, 128>}, {pipeline_mode = #tpu.pipeline_mode<synchronous>, transform_indices = @transform_3, window_bounds = array<i64: 1, 128>}, {pipeline_mode = #tpu.pipeline_mode<synchronous>, transform_indices = @transform_4, window_bounds = array<i64: 8, 128>}, {transform_indices = @transform_5, window_bounds = array<i64: 8, 8, 128>}]} {
    %c0_i32 = arith.constant 0 : i32
    %0 = arith.cmpi eq, %arg0, %c0_i32 : i32
    %1 = arith.extui %0 : i1 to i32
    %c0_i32_0 = arith.constant 0 : i32
    %2 = arith.cmpi ne, %1, %c0_i32_0 : i32
    scf.if %2 {
      %c0_55 = arith.constant 0 : index
      %c0_56 = arith.constant 0 : index
      %101 = vector.load %arg5[%c0_55, %c0_56] : memref<8x128xf32, #tpu.memory_space<vmem>>, vector<8x128xf32>
      %c0_57 = arith.constant 0 : index
      %c0_58 = arith.constant 0 : index
      %102 = vector.load %arg7[%c0_57, %c0_58] : memref<8x128xf32, #tpu.memory_space<vmem>>, vector<8x128xf32>
      tpu.vector_store %arg7[%c0_57, %c0_58], %101 {strides = array<i32>} : memref<8x128xf32, #tpu.memory_space<vmem>>, vector<8x128xf32>,
    } else {
    }
    %c0 = arith.constant 0 : index
    %c0_1 = arith.constant 0 : index
    %3 = vector.load %arg1[%c0, %c0_1] : memref<64x32xf32, #tpu.memory_space<vmem>>, vector<64x32xf32>
    %c0_2 = arith.constant 0 : index
    %c0_3 = arith.constant 0 : index
    %4 = vector.load %arg2[%c0_2, %c0_3] : memref<32x128xf32, #tpu.memory_space<vmem>>, vector<32x128xf32>
    %cst = arith.constant dense<0.000000e+00> : vector<64x128xf32>
    %5 = tpu.matmul %3, %4, %cst {dimension_numbers = #tpu.dot_dimension_numbers<[1], [0], [0], [1], [0, 0, 1, 1], [], []>} : vector<64x32xf32>, vector<32x128xf32>, vector<64x128xf32> -> vector<64x128xf32>
    %c0_4 = arith.constant 0 : index
    %c0_5 = arith.constant 0 : index
    %6 = vector.load %arg4[%c0_4, %c0_5] : memref<1x128xf32, #tpu.memory_space<vmem>>, vector<1x128xf32>
    %7 = vector.broadcast %6 : vector<1x128xf32> to vector<64x128xf32>
    %8 = arith.addf %5, %7 : vector<64x128xf32>
    %c0_6 = arith.constant 0 : index
    %c0_7 = arith.constant 0 : index
    %9 = vector.load %arg8[%c0_6, %c0_7] : memref<64x128xf32, #tpu.memory_space<vmem>>, vector<64x128xf32>
    tpu.vector_store %arg8[%c0_6, %c0_7], %8 {strides = array<i32>} : memref<64x128xf32, #tpu.memory_space<vmem>>, vector<64x128xf32>,
    %c0_8 = arith.constant 0 : index
    %c0_9 = arith.constant 0 : index
    %10 = vector.load %arg3[%c0_8, %c0_9] : memref<128x128xf32, #tpu.memory_space<vmem>>, vector<128x128xf32>
    %c0_10 = arith.constant 0 : index
    %c0_11 = arith.constant 0 : index
    %11 = vector.load %arg7[%c0_10, %c0_11] : memref<8x128xf32, #tpu.memory_space<vmem>>, vector<8x128xf32>
    %c0_i32_12 = arith.constant 0 : i32
    %c8_i32 = arith.constant 8 : i32
    %12 = arith.muli %c0_i32_12, %c8_i32 : i32
    %13 = tpu.assume_multiple %12, 8 : i32
    %14 = arith.index_cast %13 : i32 to index
    %c0_13 = arith.constant 0 : index
    %15 = vector.load %arg8[%14, %c0_13] : memref<64x128xf32, #tpu.memory_space<vmem>>, vector<8x128xf32>
    %cst_14 = arith.constant dense<0.000000e+00> : vector<8x128xf32>
    %16 = tpu.matmul %11, %10, %cst_14 {dimension_numbers = #tpu.dot_dimension_numbers<[1], [0], [0], [1], [0, 0, 1, 1], [], []>} : vector<8x128xf32>, vector<128x128xf32>, vector<8x128xf32> -> vector<8x128xf32>
    %17 = arith.addf %15, %16 : vector<8x128xf32>
    %18 = math.tanh %17 : vector<8x128xf32>
    %19 = arith.index_cast %c0_i32_12 : i32 to index
    %c0_15 = arith.constant 0 : index
    %c0_16 = arith.constant 0 : index
    %20 = vector.load %arg6[%19, %c0_15, %c0_16] : memref<8x8x128xf32, #tpu.memory_space<vmem>>, vector<1x8x128xf32>
    %21 = vector.shape_cast %20 : vector<1x8x128xf32> to vector<8x128xf32>
    %22 = vector.shape_cast %18 : vector<8x128xf32> to vector<1x8x128xf32>
    tpu.vector_store %arg6[%19, %c0_15, %c0_16], %22 {strides = array<i32>} : memref<8x8x128xf32, #tpu.memory_space<vmem>>, vector<1x8x128xf32>,
    %c1_i32 = arith.constant 1 : i32
    %c8_i32_17 = arith.constant 8 : i32
    %23 = arith.muli %c1_i32, %c8_i32_17 : i32
    %24 = tpu.assume_multiple %23, 8 : i32
    %25 = arith.index_cast %24 : i32 to index
    %c0_18 = arith.constant 0 : index
    %26 = vector.load %arg8[%25, %c0_18] : memref<64x128xf32, #tpu.memory_space<vmem>>, vector<8x128xf32>
    %cst_19 = arith.constant dense<0.000000e+00> : vector<8x128xf32>
    %27 = tpu.matmul %18, %10, %cst_19 {dimension_numbers = #tpu.dot_dimension_numbers<[1], [0], [0], [1], [0, 0, 1, 1], [], []>} : vector<8x128xf32>, vector<128x128xf32>, vector<8x128xf32> -> vector<8x128xf32>
    %28 = arith.addf %26, %27 : vector<8x128xf32>
    %29 = math.tanh %28 : vector<8x128xf32>
    %30 = arith.index_cast %c1_i32 : i32 to index
    %c0_20 = arith.constant 0 : index
    %c0_21 = arith.constant 0 : index
    %31 = vector.load %arg6[%30, %c0_20, %c0_21] : memref<8x8x128xf32, #tpu.memory_space<vmem>>, vector<1x8x128xf32>
    %32 = vector.shape_cast %31 : vector<1x8x128xf32> to vector<8x128xf32>
    %33 = vector.shape_cast %29 : vector<8x128xf32> to vector<1x8x128xf32>
    tpu.vector_store %arg6[%30, %c0_20, %c0_21], %33 {strides = array<i32>} : memref<8x8x128xf32, #tpu.memory_space<vmem>>, vector<1x8x128xf32>,
    %c2_i32 = arith.constant 2 : i32
    %c8_i32_22 = arith.constant 8 : i32
    %34 = arith.muli %c2_i32, %c8_i32_22 : i32
    %35 = tpu.assume_multiple %34, 8 : i32
    %36 = arith.index_cast %35 : i32 to index
    %c0_23 = arith.constant 0 : index
    %37 = vector.load %arg8[%36, %c0_23] : memref<64x128xf32, #tpu.memory_space<vmem>>, vector<8x128xf32>
    %cst_24 = arith.constant dense<0.000000e+00> : vector<8x128xf32>
    %38 = tpu.matmul %29, %10, %cst_24 {dimension_numbers = #tpu.dot_dimension_numbers<[1], [0], [0], [1], [0, 0, 1, 1], [], []>} : vector<8x128xf32>, vector<128x128xf32>, vector<8x128xf32> -> vector<8x128xf32>
    %39 = arith.addf %37, %38 : vector<8x128xf32>
    %40 = math.tanh %39 : vector<8x128xf32>
    %41 = arith.index_cast %c2_i32 : i32 to index
    %c0_25 = arith.constant 0 : index
    %c0_26 = arith.constant 0 : index
    %42 = vector.load %arg6[%41, %c0_25, %c0_26] : memref<8x8x128xf32, #tpu.memory_space<vmem>>, vector<1x8x128xf32>
    %43 = vector.shape_cast %42 : vector<1x8x128xf32> to vector<8x128xf32>
    %44 = vector.shape_cast %40 : vector<8x128xf32> to vector<1x8x128xf32>
    tpu.vector_store %arg6[%41, %c0_25, %c0_26], %44 {strides = array<i32>} : memref<8x8x128xf32, #tpu.memory_space<vmem>>, vector<1x8x128xf32>,
    %c3_i32 = arith.constant 3 : i32
    %c8_i32_27 = arith.constant 8 : i32
    %45 = arith.muli %c3_i32, %c8_i32_27 : i32
    %46 = tpu.assume_multiple %45, 8 : i32
    %47 = arith.index_cast %46 : i32 to index
    %c0_28 = arith.constant 0 : index
    %48 = vector.load %arg8[%47, %c0_28] : memref<64x128xf32, #tpu.memory_space<vmem>>, vector<8x128xf32>
    %cst_29 = arith.constant dense<0.000000e+00> : vector<8x128xf32>
    %49 = tpu.matmul %40, %10, %cst_29 {dimension_numbers = #tpu.dot_dimension_numbers<[1], [0], [0], [1], [0, 0, 1, 1], [], []>} : vector<8x128xf32>, vector<128x128xf32>, vector<8x128xf32> -> vector<8x128xf32>
    %50 = arith.addf %48, %49 : vector<8x128xf32>
    %51 = math.tanh %50 : vector<8x128xf32>
    %52 = arith.index_cast %c3_i32 : i32 to index
    %c0_30 = arith.constant 0 : index
    %c0_31 = arith.constant 0 : index
    %53 = vector.load %arg6[%52, %c0_30, %c0_31] : memref<8x8x128xf32, #tpu.memory_space<vmem>>, vector<1x8x128xf32>
    %54 = vector.shape_cast %53 : vector<1x8x128xf32> to vector<8x128xf32>
    %55 = vector.shape_cast %51 : vector<8x128xf32> to vector<1x8x128xf32>
    tpu.vector_store %arg6[%52, %c0_30, %c0_31], %55 {strides = array<i32>} : memref<8x8x128xf32, #tpu.memory_space<vmem>>, vector<1x8x128xf32>,
    %c4_i32 = arith.constant 4 : i32
    %c8_i32_32 = arith.constant 8 : i32
    %56 = arith.muli %c4_i32, %c8_i32_32 : i32
    %57 = tpu.assume_multiple %56, 8 : i32
    %58 = arith.index_cast %57 : i32 to index
    %c0_33 = arith.constant 0 : index
    %59 = vector.load %arg8[%58, %c0_33] : memref<64x128xf32, #tpu.memory_space<vmem>>, vector<8x128xf32>
    %cst_34 = arith.constant dense<0.000000e+00> : vector<8x128xf32>
    %60 = tpu.matmul %51, %10, %cst_34 {dimension_numbers = #tpu.dot_dimension_numbers<[1], [0], [0], [1], [0, 0, 1, 1], [], []>} : vector<8x128xf32>, vector<128x128xf32>, vector<8x128xf32> -> vector<8x128xf32>
    %61 = arith.addf %59, %60 : vector<8x128xf32>
    %62 = math.tanh %61 : vector<8x128xf32>
    %63 = arith.index_cast %c4_i32 : i32 to index
    %c0_35 = arith.constant 0 : index
    %c0_36 = arith.constant 0 : index
    %64 = vector.load %arg6[%63, %c0_35, %c0_36] : memref<8x8x128xf32, #tpu.memory_space<vmem>>, vector<1x8x128xf32>
    %65 = vector.shape_cast %64 : vector<1x8x128xf32> to vector<8x128xf32>
    %66 = vector.shape_cast %62 : vector<8x128xf32> to vector<1x8x128xf32>
    tpu.vector_store %arg6[%63, %c0_35, %c0_36], %66 {strides = array<i32>} : memref<8x8x128xf32, #tpu.memory_space<vmem>>, vector<1x8x128xf32>,
    %c5_i32 = arith.constant 5 : i32
    %c8_i32_37 = arith.constant 8 : i32
    %67 = arith.muli %c5_i32, %c8_i32_37 : i32
    %68 = tpu.assume_multiple %67, 8 : i32
    %69 = arith.index_cast %68 : i32 to index
    %c0_38 = arith.constant 0 : index
    %70 = vector.load %arg8[%69, %c0_38] : memref<64x128xf32, #tpu.memory_space<vmem>>, vector<8x128xf32>
    %cst_39 = arith.constant dense<0.000000e+00> : vector<8x128xf32>
    %71 = tpu.matmul %62, %10, %cst_39 {dimension_numbers = #tpu.dot_dimension_numbers<[1], [0], [0], [1], [0, 0, 1, 1], [], []>} : vector<8x128xf32>, vector<128x128xf32>, vector<8x128xf32> -> vector<8x128xf32>
    %72 = arith.addf %70, %71 : vector<8x128xf32>
    %73 = math.tanh %72 : vector<8x128xf32>
    %74 = arith.index_cast %c5_i32 : i32 to index
    %c0_40 = arith.constant 0 : index
    %c0_41 = arith.constant 0 : index
    %75 = vector.load %arg6[%74, %c0_40, %c0_41] : memref<8x8x128xf32, #tpu.memory_space<vmem>>, vector<1x8x128xf32>
    %76 = vector.shape_cast %75 : vector<1x8x128xf32> to vector<8x128xf32>
    %77 = vector.shape_cast %73 : vector<8x128xf32> to vector<1x8x128xf32>
    tpu.vector_store %arg6[%74, %c0_40, %c0_41], %77 {strides = array<i32>} : memref<8x8x128xf32, #tpu.memory_space<vmem>>, vector<1x8x128xf32>,
    %c6_i32 = arith.constant 6 : i32
    %c8_i32_42 = arith.constant 8 : i32
    %78 = arith.muli %c6_i32, %c8_i32_42 : i32
    %79 = tpu.assume_multiple %78, 8 : i32
    %80 = arith.index_cast %79 : i32 to index
    %c0_43 = arith.constant 0 : index
    %81 = vector.load %arg8[%80, %c0_43] : memref<64x128xf32, #tpu.memory_space<vmem>>, vector<8x128xf32>
    %cst_44 = arith.constant dense<0.000000e+00> : vector<8x128xf32>
    %82 = tpu.matmul %73, %10, %cst_44 {dimension_numbers = #tpu.dot_dimension_numbers<[1], [0], [0], [1], [0, 0, 1, 1], [], []>} : vector<8x128xf32>, vector<128x128xf32>, vector<8x128xf32> -> vector<8x128xf32>
    %83 = arith.addf %81, %82 : vector<8x128xf32>
    %84 = math.tanh %83 : vector<8x128xf32>
    %85 = arith.index_cast %c6_i32 : i32 to index
    %c0_45 = arith.constant 0 : index
    %c0_46 = arith.constant 0 : index
    %86 = vector.load %arg6[%85, %c0_45, %c0_46] : memref<8x8x128xf32, #tpu.memory_space<vmem>>, vector<1x8x128xf32>
    %87 = vector.shape_cast %86 : vector<1x8x128xf32> to vector<8x128xf32>
    %88 = vector.shape_cast %84 : vector<8x128xf32> to vector<1x8x128xf32>
    tpu.vector_store %arg6[%85, %c0_45, %c0_46], %88 {strides = array<i32>} : memref<8x8x128xf32, #tpu.memory_space<vmem>>, vector<1x8x128xf32>,
    %c7_i32 = arith.constant 7 : i32
    %c8_i32_47 = arith.constant 8 : i32
    %89 = arith.muli %c7_i32, %c8_i32_47 : i32
    %90 = tpu.assume_multiple %89, 8 : i32
    %91 = arith.index_cast %90 : i32 to index
    %c0_48 = arith.constant 0 : index
    %92 = vector.load %arg8[%91, %c0_48] : memref<64x128xf32, #tpu.memory_space<vmem>>, vector<8x128xf32>
    %cst_49 = arith.constant dense<0.000000e+00> : vector<8x128xf32>
    %93 = tpu.matmul %84, %10, %cst_49 {dimension_numbers = #tpu.dot_dimension_numbers<[1], [0], [0], [1], [0, 0, 1, 1], [], []>} : vector<8x128xf32>, vector<128x128xf32>, vector<8x128xf32> -> vector<8x128xf32>
    %94 = arith.addf %92, %93 : vector<8x128xf32>
    %95 = math.tanh %94 : vector<8x128xf32>
    %96 = arith.index_cast %c7_i32 : i32 to index
    %c0_50 = arith.constant 0 : index
    %c0_51 = arith.constant 0 : index
    %97 = vector.load %arg6[%96, %c0_50, %c0_51] : memref<8x8x128xf32, #tpu.memory_space<vmem>>, vector<1x8x128xf32>
    %98 = vector.shape_cast %97 : vector<1x8x128xf32> to vector<8x128xf32>
    %99 = vector.shape_cast %95 : vector<8x128xf32> to vector<1x8x128xf32>
    tpu.vector_store %arg6[%96, %c0_50, %c0_51], %99 {strides = array<i32>} : memref<8x8x128xf32, #tpu.memory_space<vmem>>, vector<1x8x128xf32>,
    %c8_i32_52 = arith.constant 8 : i32
    %c0_53 = arith.constant 0 : index
    %c0_54 = arith.constant 0 : index
    %100 = vector.load %arg7[%c0_53, %c0_54] : memref<8x128xf32, #tpu.memory_space<vmem>>, vector<8x128xf32>
    tpu.vector_store %arg7[%c0_53, %c0_54], %95 {strides = array<i32>} : memref<8x128xf32, #tpu.memory_space<vmem>>, vector<8x128xf32>,
    return
  }
  func.func @transform_0(%arg0: i32) -> (i32, i32) {
    %c0_i32 = arith.constant 0 : i32
    %c0_i32_0 = arith.constant 0 : i32
    return %arg0, %c0_i32 : i32, i32
  }
  func.func @transform_1(%arg0: i32) -> (i32, i32) {
    %c0_i32 = arith.constant 0 : i32
    %c0_i32_0 = arith.constant 0 : i32
    %c0_i32_1 = arith.constant 0 : i32
    return %c0_i32, %c0_i32_0 : i32, i32
  }
  func.func @transform_2(%arg0: i32) -> (i32, i32) {
    %c0_i32 = arith.constant 0 : i32
    %c0_i32_0 = arith.constant 0 : i32
    %c0_i32_1 = arith.constant 0 : i32
    return %c0_i32, %c0_i32_0 : i32, i32
  }
  func.func @transform_3(%arg0: i32) -> (i32, i32) {
    %c0_i32 = arith.constant 0 : i32
    %c0_i32_0 = arith.constant 0 : i32
    %c0_i32_1 = arith.constant 0 : i32
    return %c0_i32, %c0_i32_0 : i32, i32
  }
  func.func @transform_4(%arg0: i32) -> (i32, i32) {
    %c0_i32 = arith.constant 0 : i32
    %c0_i32_0 = arith.constant 0 : i32
    %c0_i32_1 = arith.constant 0 : i32
    return %c0_i32, %c0_i32_0 : i32, i32
  }
  func.func @transform_5(%arg0: i32) -> (i32, i32, i32) {
    %c0_i32 = arith.constant 0 : i32
    %c0_i32_0 = arith.constant 0 : i32
    %c0_i32_1 = arith.constant 0 : i32
    return %arg0, %c0_i32, %c0_i32_0 : i32, i32, i32
  }
}

</mosaic_0001>

<llo_original>
// kernel: tpu_custom_call.1
$region0: #{tpu_custom_call.1}
  #allocation0 [shape = 'u32[]', space=smem, size = 0x4, offset = 0x4, fixed_abs, tag = 'smem constant byte address 0x4 - core index']
  #allocation1 [shape = 'u32[144,128]{1,0:T(1,128)}', space=vmem, size = 0x12000, scoped, tag = 'internal scratch']
  #allocation2 [shape = 'f32[8,128]{1,0:T(8,128)}', space=vmem, size = 0x1000, scoped, tag = 'scratch operand']
  #allocation3 [shape = 'f32[64,128]{1,0:T(8,128)}', space=vmem, size = 0x8000, scoped, tag = 'scratch operand']
  %s0 = inlined_call_operand.vmem [shape: f32[64,32], index: 0, kind: input, shape index: {}]
  %s1 = inlined_call_operand.vmem [shape: f32[32,128], index: 1, kind: input, shape index: {}]
  %s2 = inlined_call_operand.hbm [shape: f32[128,128], index: 2, kind: input, shape index: {}]
  %s3 = inlined_call_operand.vmem [shape: f32[1,128], index: 3, kind: input, shape index: {}]
  %s4 = inlined_call_operand.vmem [shape: f32[8,128], index: 4, kind: input, shape index: {}]
  %s5 = inlined_call_operand.hbm [shape: f32[8,8,128], index: 5, kind: output, shape index: {}]
  %s6 = sld [smem:[#allocation0]]
  $region38: #{tpu_custom_call.1} parent=0
    _
  %s8 = ssub.s32 1, %s6
  %s9 = scalar_select 0, %s8, %s6
  $region1: #{tpu_custom_call.1} parent=0
    #allocation4 [shape = 'u8[65536]{0}', space=vmem, size = 0x10000, scoped, tag = 'input window, operand 2, single buffered']
    #allocation5 [shape = 's32[1]{0}', space=sflag, size = 0x4, scoped, tag = 'scoped memory for tpu_custom_call.1']
    #allocation6 [shape = 's32[1]{0}', space=sflag, size = 0x4, scoped, tag = 'scoped memory for tpu_custom_call.1']
    #allocation7 [shape = 'u8[32768]{0}', space=vmem, size = 0x8000, scoped, tag = 'output window, operand 0, single buffered']
    %10 = vsyncpa [#allocation5], 0
    %11 = vsyncpa [#allocation6], 0
    // Predicated region
    $region2: #{tpu_custom_call.1} parent=1 // pred_check
      _
    $region3: #{tpu_custom_call.1} parent=1 // pred_check_branch
      %13 = sbr.rel (0) target = $region5
    $region4: #{tpu_custom_call.1} parent=1 // pred_region
      _
    $region5: #{tpu_custom_call.1} parent=1 // pred_fallthru
      _
    // Predicated region
    $region6: #{tpu_custom_call.1} parent=1 // pred_check
      _
    $region7: #{tpu_custom_call.1} parent=1 // pred_check_branch
      %15 = sbr.rel (0) target = $region9
    $region8: #{tpu_custom_call.1} parent=1 // pred_region
      _
    $region9: #{tpu_custom_call.1} parent=1 // pred_fallthru
      _
    // Predicated region
    $region10: #{tpu_custom_call.1} parent=1 // pred_check
      _
    $region11: #{tpu_custom_call.1} parent=1 // pred_check_branch
      %17 = sbr.rel (0) target = $region13
    $region12: #{tpu_custom_call.1} parent=1 // pred_region
      %s19 = ssub.s32 2048, 2048
      %20 = vsyncadd [#allocation5], %s19
      %s21 = sshll.u32 [#allocation4], 4
      %s22 = int_to_ptr.vmem [resolvable:$true] %s21
      %27 = dma.hbm_to_vmem [thread:$0]  %s2, 2048, %s22, [#allocation5], 128, 128, 8
    $region13: #{tpu_custom_call.1} parent=1 // pred_fallthru
      _
    // Predicated region
    $region14: #{tpu_custom_call.1} parent=1 // pred_check
      _
    $region15: #{tpu_custom_call.1} parent=1 // pred_check_branch
      %29 = sbr.rel (0) target = $region17
    $region16: #{tpu_custom_call.1} parent=1 // pred_region
      _
    $region17: #{tpu_custom_call.1} parent=1 // pred_fallthru
      _
    // Predicated region
    $region18: #{tpu_custom_call.1} parent=1 // pred_check
      _
    $region19: #{tpu_custom_call.1} parent=1 // pred_check_branch
      %31 = sbr.rel (0) target = $region21
    $region20: #{tpu_custom_call.1} parent=1 // pred_region
      _
    $region21: #{tpu_custom_call.1} parent=1 // pred_fallthru
      _
    // Predicated region
    $region22: #{tpu_custom_call.1} parent=1 // pred_check
      _
    $region23: #{tpu_custom_call.1} parent=1 // pred_check_branch
      %33 = sbr.rel (0) target = $region25
    $region24: #{tpu_custom_call.1} parent=1 // pred_region
      %34 = dma.done [#allocation5], 2048
    $region25: #{tpu_custom_call.1} parent=1 // pred_fallthru
      _
    %p35 = scmp.eq.s32.totalorder 0, 0
    // Predicated region
    $region26: #{tpu_custom_call.1} parent=1 // pred_check
      %p36 = pneg %p35
    $region27: #{tpu_custom_call.1} parent=1 // pred_check_branch
      %38 = sbr.rel (%p36) target = $region29
    $region28: #{tpu_custom_call.1} parent=1 // pred_region
      %v39 = vld [vmem:[%s4] sm:$0xff]
      %40 = vst [vmem:[#allocation2] sm:$0xff] %v39
    $region29: #{tpu_custom_call.1} parent=1 // pred_fallthru
      _
    %v41 = vld [vmem:[%s0] sm:$0xff]
    %v42 = vld [vmem:[%s0 + $0x8] sm:$0xff]
    %v43 = vld [vmem:[%s0 + $0x10] sm:$0xff]
    %v44 = vld [vmem:[%s0 + $0x18] sm:$0xff]
    %v45 = vld [vmem:[%s0 + $0x20] sm:$0xff]
    %v46 = vld [vmem:[%s0 + $0x28] sm:$0xff]
    %v47 = vld [vmem:[%s0 + $0x30] sm:$0xff]
    %v48 = vld [vmem:[%s0 + $0x38] sm:$0xff]
    %v49 = vld [vmem:[%s1] sm:$0xff]
    %v50 = vld [vmem:[%s1 + $0x8] sm:$0xff]
    %v51 = vld [vmem:[%s1 + $0x10] sm:$0xff]
    %v52 = vld [vmem:[%s1 + $0x18] sm:$0xff]
    %v53 = vld [vmem:[%s3] sm:$0x1]
    %v55 = vlaneseq
    %v56 = vshrl.u32 %v55, 7
    %v57 = vsub.s32 0, %v56
    %v58 = vrot.slane %v53, %v57
    %vm60 = vcmask 261120
    %v62 = vsel %vm60, %v41, 0
    %v65 = vsel %vm60, %v42, 0
    %v68 = vsel %vm60, %v43, 0
    %v71 = vsel %vm60, %v44, 0
    %v74 = vsel %vm60, %v45, 0
    %v77 = vsel %vm60, %v46, 0
    %v80 = vsel %vm60, %v47, 0
    %v83 = vsel %vm60, %v48, 0
    %85 = vmatprep.subr.mxu0 0.0
    %86 = vmatpush1.msra.mxu0 0.0
    %87 = vmatprep.subr.mxu0 0.0
    %88 = vmatpush1.msra.mxu0 0.0
    %89 = vmatprep.subr.mxu0 0.0
    %90 = vmatpush1.msra.mxu0 0.0
    %91 = vmatprep.subr.mxu0 0.0
    %92 = vmatpush1.msra.mxu0 0.0
    %93 = vmatprep.subr.mxu0 0.0
    %94 = vmatpush1.msra.mxu0 0.0
    %95 = vmatprep.subr.mxu0 0.0
    %96 = vmatpush1.msra.mxu0 0.0
    %97 = vmatprep.subr.mxu0 0.0
    %98 = vmatpush1.msra.mxu0 0.0
    %99 = vmatprep.subr.mxu0 0.0
    %100 = vmatpush1.msra.mxu0 0.0
    %101 = vmatprep.subr.mxu0 0.0
    %102 = vmatpush1.msra.mxu0 0.0
    %103 = vmatprep.subr.mxu0 0.0
    %104 = vmatpush1.msra.mxu0 0.0
    %105 = vmatprep.subr.mxu0 0.0
    %106 = vmatpush1.msra.mxu0 0.0
    %107 = vmatprep.subr.mxu0 0.0
    %108 = vmatpush1.msra.mxu0 0.0
    %109 = vmatprep.subr.mxu0 0.0
    %110 = vmatpush1.msra.mxu0 %v52
    %111 = vmatprep.subr.mxu0 0.0
    %112 = vmatpush1.msra.mxu0 %v51
    %113 = vmatprep.subr.mxu0 0.0
    %114 = vmatpush1.msra.mxu0 %v50
    %115 = vmatprep.subr.mxu0 0.0
    %116 = vmatpush1.msra.mxu0 %v49
    %117 = vmatprep.subr.mxu0 0.0
    %118 = vmatpush2.msra.mxu0 0.0
    %119 = vmatprep.subr.mxu0 0.0
    %120 = vmatpush2.msra.mxu0 0.0
    %121 = vmatprep.subr.mxu0 0.0
    %122 = vmatpush2.msra.mxu0 0.0
    %123 = vmatprep.subr.mxu0 0.0
    %124 = vmatpush2.msra.mxu0 0.0
    %125 = vmatprep.subr.mxu0 0.0
    %126 = vmatpush2.msra.mxu0 0.0
    %127 = vmatprep.subr.mxu0 0.0
    %128 = vmatpush2.msra.mxu0 0.0
    %129 = vmatprep.subr.mxu0 0.0
    %130 = vmatpush2.msra.mxu0 0.0
    %131 = vmatprep.subr.mxu0 0.0
    %132 = vmatpush2.msra.mxu0 0.0
    %133 = vmatprep.subr.mxu0 0.0
    %134 = vmatpush2.msra.mxu0 0.0
    %135 = vmatprep.subr.mxu0 0.0
    %136 = vmatpush2.msra.mxu0 0.0
    %137 = vmatprep.subr.mxu0 0.0
    %138 = vmatpush2.msra.mxu0 0.0
    %139 = vmatprep.subr.mxu0 0.0
    %140 = vmatpush2.msra.mxu0 0.0
    %141 = vmatprep.subr.mxu0 0.0
    %142 = vmatpush2.msra.mxu0 0.0
    %143 = vmatprep.subr.mxu0 0.0
    %144 = vmatpush2.msra.mxu0 0.0
    %145 = vmatprep.subr.mxu0 0.0
    %146 = vmatpush2.msra.mxu0 0.0
    %147 = vmatprep.subr.mxu0 0.0
    %148 = vmatpush2.msra.mxu0 0.0
    %149 = vmatprep.mubr.f32.mxu0 0.0
    %150 = vmatmul.mubr.f32.gmra.mxu0 %v62
    %v151 = vpop.f32.mrf.mxu0
    %v152 = vadd.f32 %v58, %v151
    %v153 = vpop.f32.mrf.mxu0
    %154 = vmatprep.mubr.f32.mxu0 0.0
    %155 = vmatmul.mubr.f32.gmra.mxu0 %v65
    %v156 = vpop.f32.mrf.mxu0
    %v157 = vadd.f32 %v58, %v156
    %v158 = vpop.f32.mrf.mxu0
    %159 = vmatprep.mubr.f32.mxu0 0.0
    %160 = vmatmul.mubr.f32.gmra.mxu0 %v68
    %v161 = vpop.f32.mrf.mxu0
    %v162 = vadd.f32 %v58, %v161
    %v163 = vpop.f32.mrf.mxu0
    %164 = vmatprep.mubr.f32.mxu0 0.0
    %165 = vmatmul.mubr.f32.gmra.mxu0 %v71
    %v166 = vpop.f32.mrf.mxu0
    %v167 = vadd.f32 %v58, %v166
    %v168 = vpop.f32.mrf.mxu0
    %169 = vmatprep.mubr.f32.mxu0 0.0
    %170 = vmatmul.mubr.f32.gmra.mxu0 %v74
    %v171 = vpop.f32.mrf.mxu0
    %v172 = vadd.f32 %v58, %v171
    %v173 = vpop.f32.mrf.mxu0
    %174 = vmatprep.mubr.f32.mxu0 0.0
    %175 = vmatmul.mubr.f32.gmra.mxu0 %v77
    %v176 = vpop.f32.mrf.mxu0
    %v177 = vadd.f32 %v58, %v176
    %v178 = vpop.f32.mrf.mxu0
    %179 = vmatprep.mubr.f32.mxu0 0.0
    %180 = vmatmul.mubr.f32.gmra.mxu0 %v80
    %v181 = vpop.f32.mrf.mxu0
    %v182 = vadd.f32 %v58, %v181
    %v183 = vpop.f32.mrf.mxu0
    %184 = vmatprep.mubr.f32.mxu0 0.0
    %185 = vmatmul.mubr.f32.gmra.mxu0 %v83
    %v186 = vpop.f32.mrf.mxu0
    %v187 = vadd.f32 %v58, %v186
    %v188 = vpop.f32.mrf.mxu0
    %189 = vdwg.mxu0
    %190 = vst [vmem:[#allocation3] sm:$0xff] %v152
    %191 = vst [vmem:[#allocation3 + $0x8] sm:$0xff] %v157
    %192 = vst [vmem:[#allocation3 + $0x10] sm:$0xff] %v162
    %193 = vst [vmem:[#allocation3 + $0x18] sm:$0xff] %v167
    %194 = vst [vmem:[#allocation3 + $0x20] sm:$0xff] %v172
    %195 = vst [vmem:[#allocation3 + $0x28] sm:$0xff] %v177
    %196 = vst [vmem:[#allocation3 + $0x30] sm:$0xff] %v182
    %197 = vst [vmem:[#allocation3 + $0x38] sm:$0xff] %v187
    %v198 = vld [vmem:[#allocation4] sm:$0xff]
    %v199 = vld [vmem:[#allocation4 + $0x8] sm:$0xff]
    %v200 = vld [vmem:[#allocation4 + $0x10] sm:$0xff]
    %v201 = vld [vmem:[#allocation4 + $0x18] sm:$0xff]
    %v202 = vld [vmem:[#allocation4 + $0x20] sm:$0xff]
    %v203 = vld [vmem:[#allocation4 + $0x28] sm:$0xff]
    %v204 = vld [vmem:[#allocation4 + $0x30] sm:$0xff]
    %v205 = vld [vmem:[#allocation4 + $0x38] sm:$0xff]
    %v206 = vld [vmem:[#allocation4 + $0x40] sm:$0xff]
    %v207 = vld [vmem:[#allocation4 + $0x48] sm:$0xff]
    %v208 = vld [vmem:[#allocation4 + $0x50] sm:$0xff]
    %v209 = vld [vmem:[#allocation4 + $0x58] sm:$0xff]
    %v210 = vld [vmem:[#allocation4 + $0x60] sm:$0xff]
    %v211 = vld [vmem:[#allocation4 + $0x68] sm:$0xff]
    %v212 = vld [vmem:[#allocation4 + $0x70] sm:$0xff]
    %v213 = vld [vmem:[#allocation4 + $0x78] sm:$0xff]
    %v214 = vld [vmem:[#allocation2] sm:$0xff]
    %v215 = vld [vmem:[#allocation3] sm:$0xff]
    %216 = vmatprep.subr.mxu0 0.0
    %217 = vmatpush1.msra.mxu0 %v213
    %218 = vmatprep.subr.mxu0 0.0
    %219 = vmatpush1.msra.mxu0 %v212
    %220 = vmatprep.subr.mxu0 0.0
    %221 = vmatpush1.msra.mxu0 %v211
    %222 = vmatprep.subr.mxu0 0.0
    %223 = vmatpush1.msra.mxu0 %v210
    %224 = vmatprep.subr.mxu0 0.0
    %225 = vmatpush1.msra.mxu0 %v209
    %226 = vmatprep.subr.mxu0 0.0
    %227 = vmatpush1.msra.mxu0 %v208
    %228 = vmatprep.subr.mxu0 0.0
    %229 = vmatpush1.msra.mxu0 %v207
    %230 = vmatprep.subr.mxu0 0.0
    %231 = vmatpush1.msra.mxu0 %v206
    %232 = vmatprep.subr.mxu0 0.0
    %233 = vmatpush1.msra.mxu0 %v205
    %234 = vmatprep.subr.mxu0 0.0
    %235 = vmatpush1.msra.mxu0 %v204
    %236 = vmatprep.subr.mxu0 0.0
    %237 = vmatpush1.msra.mxu0 %v203
    %238 = vmatprep.subr.mxu0 0.0
    %239 = vmatpush1.msra.mxu0 %v202
    %240 = vmatprep.subr.mxu0 0.0
    %241 = vmatpush1.msra.mxu0 %v201
    %242 = vmatprep.subr.mxu0 0.0
    %243 = vmatpush1.msra.mxu0 %v200
    %244 = vmatprep.subr.mxu0 0.0
    %245 = vmatpush1.msra.mxu0 %v199
    %246 = vmatprep.subr.mxu0 0.0
    %247 = vmatpush1.msra.mxu0 %v198
    %248 = vmatprep.subr.mxu0 0.0
    %249 = vmatpush2.msra.mxu0 0.0
    %250 = vmatprep.subr.mxu0 0.0
    %251 = vmatpush2.msra.mxu0 0.0
    %252 = vmatprep.subr.mxu0 0.0
    %253 = vmatpush2.msra.mxu0 0.0
    %254 = vmatprep.subr.mxu0 0.0
    %255 = vmatpush2.msra.mxu0 0.0
    %256 = vmatprep.subr.mxu0 0.0
    %257 = vmatpush2.msra.mxu0 0.0
    %258 = vmatprep.subr.mxu0 0.0
    %259 = vmatpush2.msra.mxu0 0.0
    %260 = vmatprep.subr.mxu0 0.0
    %261 = vmatpush2.msra.mxu0 0.0
    %262 = vmatprep.subr.mxu0 0.0
    %263 = vmatpush2.msra.mxu0 0.0
    %264 = vmatprep.subr.mxu0 0.0
    %265 = vmatpush2.msra.mxu0 0.0
    %266 = vmatprep.subr.mxu0 0.0
    %267 = vmatpush2.msra.mxu0 0.0
    %268 = vmatprep.subr.mxu0 0.0
    %269 = vmatpush2.msra.mxu0 0.0
    %270 = vmatprep.subr.mxu0 0.0
    %271 = vmatpush2.msra.mxu0 0.0
    %272 = vmatprep.subr.mxu0 0.0
    %273 = vmatpush2.msra.mxu0 0.0
    %274 = vmatprep.subr.mxu0 0.0
    %275 = vmatpush2.msra.mxu0 0.0
    %276 = vmatprep.subr.mxu0 0.0
    %277 = vmatpush2.msra.mxu0 0.0
    %278 = vmatprep.subr.mxu0 0.0
    %279 = vmatpush2.msra.mxu0 0.0
    %280 = vmatprep.mubr.f32.mxu0 0.0
    %281 = vmatmul.mubr.f32.gmra.mxu0 %v214
    %v282 = vpop.f32.mrf.mxu0
    %v283 = vadd.f32 0.0, %v282
    %v284 = vpop.f32.mrf.mxu0
    %285 = vdwg.mxu0
    %v286 = vadd.f32 %v215, %v283
    %v287 = vtanh.pop %v286
    %288 = vst [vmem:[#allocation7] sm:$0xff] %v287
    %s289 = scalar_lea.vmem [#allocation3], 8
    %v290 = vld [vmem:[%s289] sm:$0xff]
    %291 = vmatprep.subr.mxu0 0.0
    %292 = vmatpush1.msra.mxu0 %v213
    %293 = vmatprep.subr.mxu0 0.0
    %294 = vmatpush1.msra.mxu0 %v212
    %295 = vmatprep.subr.mxu0 0.0
    %296 = vmatpush1.msra.mxu0 %v211
    %297 = vmatprep.subr.mxu0 0.0
    %298 = vmatpush1.msra.mxu0 %v210
    %299 = vmatprep.subr.mxu0 0.0
    %300 = vmatpush1.msra.mxu0 %v209
    %301 = vmatprep.subr.mxu0 0.0
    %302 = vmatpush1.msra.mxu0 %v208
    %303 = vmatprep.subr.mxu0 0.0
    %304 = vmatpush1.msra.mxu0 %v207
    %305 = vmatprep.subr.mxu0 0.0
    %306 = vmatpush1.msra.mxu0 %v206
    %307 = vmatprep.subr.mxu0 0.0
    %308 = vmatpush1.msra.mxu0 %v205
    %309 = vmatprep.subr.mxu0 0.0
    %310 = vmatpush1.msra.mxu0 %v204
    %311 = vmatprep.subr.mxu0 0.0
    %312 = vmatpush1.msra.mxu0 %v203
    %313 = vmatprep.subr.mxu0 0.0
    %314 = vmatpush1.msra.mxu0 %v202
    %315 = vmatprep.subr.mxu0 0.0
    %316 = vmatpush1.msra.mxu0 %v201
    %317 = vmatprep.subr.mxu0 0.0
    %318 = vmatpush1.msra.mxu0 %v200
    %319 = vmatprep.subr.mxu0 0.0
    %320 = vmatpush1.msra.mxu0 %v199
    %321 = vmatprep.subr.mxu0 0.0
    %322 = vmatpush1.msra.mxu0 %v198
    %323 = vmatprep.subr.mxu0 0.0
    %324 = vmatpush2.msra.mxu0 0.0
    %325 = vmatprep.subr.mxu0 0.0
    %326 = vmatpush2.msra.mxu0 0.0
    %327 = vmatprep.subr.mxu0 0.0
    %328 = vmatpush2.msra.mxu0 0.0
    %329 = vmatprep.subr.mxu0 0.0
    %330 = vmatpush2.msra.mxu0 0.0
    %331 = vmatprep.subr.mxu0 0.0
    %332 = vmatpush2.msra.mxu0 0.0
    %333 = vmatprep.subr.mxu0 0.0
    %334 = vmatpush2.msra.mxu0 0.0
    %335 = vmatprep.subr.mxu0 0.0
    %336 = vmatpush2.msra.mxu0 0.0
    %337 = vmatprep.subr.mxu0 0.0
    %338 = vmatpush2.msra.mxu0 0.0
    %339 = vmatprep.subr.mxu0 0.0
    %340 = vmatpush2.msra.mxu0 0.0
    %341 = vmatprep.subr.mxu0 0.0
    %342 = vmatpush2.msra.mxu0 0.0
    %343 = vmatprep.subr.mxu0 0.0
    %344 = vmatpush2.msra.mxu0 0.0
    %345 = vmatprep.subr.mxu0 0.0
    %346 = vmatpush2.msra.mxu0 0.0
    %347 = vmatprep.subr.mxu0 0.0
    %348 = vmatpush2.msra.mxu0 0.0
    %349 = vmatprep.subr.mxu0 0.0
    %350 = vmatpush2.msra.mxu0 0.0
    %351 = vmatprep.subr.mxu0 0.0
    %352 = vmatpush2.msra.mxu0 0.0
    %353 = vmatprep.subr.mxu0 0.0
    %354 = vmatpush2.msra.mxu0 0.0
    %355 = vmatprep.mubr.f32.mxu0 0.0
    %356 = vmatmul.mubr.f32.gmra.mxu0 %v287
    %v357 = vpop.f32.mrf.mxu0
    %v358 = vadd.f32 0.0, %v357
    %v359 = vpop.f32.mrf.mxu0
    %360 = vdwg.mxu0
    %v361 = vadd.f32 %v290, %v358
    %v362 = vtanh.pop %v361
    %s363 = scalar_lea.vmem [#allocation7], 8
    %364 = vst [vmem:[%s363] sm:$0xff] %v362
    %s365 = scalar_lea.vmem [#allocation3], 16
    %v366 = vld [vmem:[%s365] sm:$0xff]
    %367 = vmatprep.subr.mxu0 0.0
    %368 = vmatpush1.msra.mxu0 %v213
    %369 = vmatprep.subr.mxu0 0.0
    %370 = vmatpush1.msra.mxu0 %v212
    %371 = vmatprep.subr.mxu0 0.0
    %372 = vmatpush1.msra.mxu0 %v211
    %373 = vmatprep.subr.mxu0 0.0
    %374 = vmatpush1.msra.mxu0 %v210
    %375 = vmatprep.subr.mxu0 0.0
    %376 = vmatpush1.msra.mxu0 %v209
    %377 = vmatprep.subr.mxu0 0.0
    %378 = vmatpush1.msra.mxu0 %v208
    %379 = vmatprep.subr.mxu0 0.0
    %380 = vmatpush1.msra.mxu0 %v207
    %381 = vmatprep.subr.mxu0 0.0
    %382 = vmatpush1.msra.mxu0 %v206
    %383 = vmatprep.subr.mxu0 0.0
    %384 = vmatpush1.msra.mxu0 %v205
    %385 = vmatprep.subr.mxu0 0.0
    %386 = vmatpush1.msra.mxu0 %v204
    %387 = vmatprep.subr.mxu0 0.0
    %388 = vmatpush1.msra.mxu0 %v203
    %389 = vmatprep.subr.mxu0 0.0
    %390 = vmatpush1.msra.mxu0 %v202
    %391 = vmatprep.subr.mxu0 0.0
    %392 = vmatpush1.msra.mxu0 %v201
    %393 = vmatprep.subr.mxu0 0.0
    %394 = vmatpush1.msra.mxu0 %v200
    %395 = vmatprep.subr.mxu0 0.0
    %396 = vmatpush1.msra.mxu0 %v199
    %397 = vmatprep.subr.mxu0 0.0
    %398 = vmatpush1.msra.mxu0 %v198
    %399 = vmatprep.subr.mxu0 0.0
    %400 = vmatpush2.msra.mxu0 0.0
    %401 = vmatprep.subr.mxu0 0.0
    %402 = vmatpush2.msra.mxu0 0.0
    %403 = vmatprep.subr.mxu0 0.0
    %404 = vmatpush2.msra.mxu0 0.0
    %405 = vmatprep.subr.mxu0 0.0
    %406 = vmatpush2.msra.mxu0 0.0
    %407 = vmatprep.subr.mxu0 0.0
    %408 = vmatpush2.msra.mxu0 0.0
    %409 = vmatprep.subr.mxu0 0.0
    %410 = vmatpush2.msra.mxu0 0.0
    %411 = vmatprep.subr.mxu0 0.0
    %412 = vmatpush2.msra.mxu0 0.0
    %413 = vmatprep.subr.mxu0 0.0
    %414 = vmatpush2.msra.mxu0 0.0
    %415 = vmatprep.subr.mxu0 0.0
    %416 = vmatpush2.msra.mxu0 0.0
    %417 = vmatprep.subr.mxu0 0.0
    %418 = vmatpush2.msra.mxu0 0.0
    %419 = vmatprep.subr.mxu0 0.0
    %420 = vmatpush2.msra.mxu0 0.0
    %421 = vmatprep.subr.mxu0 0.0
    %422 = vmatpush2.msra.mxu0 0.0
    %423 = vmatprep.subr.mxu0 0.0
    %424 = vmatpush2.msra.mxu0 0.0
    %425 = vmatprep.subr.mxu0 0.0
    %426 = vmatpush2.msra.mxu0 0.0
    %427 = vmatprep.subr.mxu0 0.0
    %428 = vmatpush2.msra.mxu0 0.0
    %429 = vmatprep.subr.mxu0 0.0
    %430 = vmatpush2.msra.mxu0 0.0
    %431 = vmatprep.mubr.f32.mxu0 0.0
    %432 = vmatmul.mubr.f32.gmra.mxu0 %v362
    %v433 = vpop.f32.mrf.mxu0
    %v434 = vadd.f32 0.0, %v433
    %v435 = vpop.f32.mrf.mxu0
    %436 = vdwg.mxu0
    %v437 = vadd.f32 %v366, %v434
    %v438 = vtanh.pop %v437
    %s439 = scalar_lea.vmem [#allocation7], 16
    %440 = vst [vmem:[%s439] sm:$0xff] %v438
    %s441 = scalar_lea.vmem [#allocation3], 24
    %v442 = vld [vmem:[%s441] sm:$0xff]
    %443 = vmatprep.subr.mxu0 0.0
    %444 = vmatpush1.msra.mxu0 %v213
    %445 = vmatprep.subr.mxu0 0.0
    %446 = vmatpush1.msra.mxu0 %v212
    %447 = vmatprep.subr.mxu0 0.0
    %448 = vmatpush1.msra.mxu0 %v211
    %449 = vmatprep.subr.mxu0 0.0
    %450 = vmatpush1.msra.mxu0 %v210
    %451 = vmatprep.subr.mxu0 0.0
    %452 = vmatpush1.msra.mxu0 %v209
    %453 = vmatprep.subr.mxu0 0.0
    %454 = vmatpush1.msra.mxu0 %v208
    %455 = vmatprep.subr.mxu0 0.0
    %456 = vmatpush1.msra.mxu0 %v207
    %457 = vmatprep.subr.mxu0 0.0
    %458 = vmatpush1.msra.mxu0 %v206
    %459 = vmatprep.subr.mxu0 0.0
    %460 = vmatpush1.msra.mxu0 %v205
    %461 = vmatprep.subr.mxu0 0.0
    %462 = vmatpush1.msra.mxu0 %v204
    %463 = vmatprep.subr.mxu0 0.0
    %464 = vmatpush1.msra.mxu0 %v203
    %465 = vmatprep.subr.mxu0 0.0
    %466 = vmatpush1.msra.mxu0 %v202
    %467 = vmatprep.subr.mxu0 0.0
    %468 = vmatpush1.msra.mxu0 %v201
    %469 = vmatprep.subr.mxu0 0.0
    %470 = vmatpush1.msra.mxu0 %v200
    %471 = vmatprep.subr.mxu0 0.0
    %472 = vmatpush1.msra.mxu0 %v199
    %473 = vmatprep.subr.mxu0 0.0
    %474 = vmatpush1.msra.mxu0 %v198
    %475 = vmatprep.subr.mxu0 0.0
    %476 = vmatpush2.msra.mxu0 0.0
    %477 = vmatprep.subr.mxu0 0.0
    %478 = vmatpush2.msra.mxu0 0.0
    %479 = vmatprep.subr.mxu0 0.0
    %480 = vmatpush2.msra.mxu0 0.0
    %481 = vmatprep.subr.mxu0 0.0
    %482 = vmatpush2.msra.mxu0 0.0
    %483 = vmatprep.subr.mxu0 0.0
    %484 = vmatpush2.msra.mxu0 0.0
    %485 = vmatprep.subr.mxu0 0.0
    %486 = vmatpush2.msra.mxu0 0.0
    %487 = vmatprep.subr.mxu0 0.0
    %488 = vmatpush2.msra.mxu0 0.0
    %489 = vmatprep.subr.mxu0 0.0
    %490 = vmatpush2.msra.mxu0 0.0
    %491 = vmatprep.subr.mxu0 0.0
    %492 = vmatpush2.msra.mxu0 0.0
    %493 = vmatprep.subr.mxu0 0.0
    %494 = vmatpush2.msra.mxu0 0.0
    %495 = vmatprep.subr.mxu0 0.0
    %496 = vmatpush2.msra.mxu0 0.0
    %497 = vmatprep.subr.mxu0 0.0
    %498 = vmatpush2.msra.mxu0 0.0
    %499 = vmatprep.subr.mxu0 0.0
    %500 = vmatpush2.msra.mxu0 0.0
    %501 = vmatprep.subr.mxu0 0.0
    %502 = vmatpush2.msra.mxu0 0.0
    %503 = vmatprep.subr.mxu0 0.0
    %504 = vmatpush2.msra.mxu0 0.0
    %505 = vmatprep.subr.mxu0 0.0
    %506 = vmatpush2.msra.mxu0 0.0
    %507 = vmatprep.mubr.f32.mxu0 0.0
    %508 = vmatmul.mubr.f32.gmra.mxu0 %v438
    %v509 = vpop.f32.mrf.mxu0
    %v510 = vadd.f32 0.0, %v509
    %v511 = vpop.f32.mrf.mxu0
    %512 = vdwg.mxu0
    %v513 = vadd.f32 %v442, %v510
    %v514 = vtanh.pop %v513
    %s515 = scalar_lea.vmem [#allocation7], 24
    %516 = vst [vmem:[%s515] sm:$0xff] %v514
    %s517 = scalar_lea.vmem [#allocation3], 32
    %v518 = vld [vmem:[%s517] sm:$0xff]
    %519 = vmatprep.subr.mxu0 0.0
    %520 = vmatpush1.msra.mxu0 %v213
    %521 = vmatprep.subr.mxu0 0.0
    %522 = vmatpush1.msra.mxu0 %v212
    %523 = vmatprep.subr.mxu0 0.0
    %524 = vmatpush1.msra.mxu0 %v211
    %525 = vmatprep.subr.mxu0 0.0
    %526 = vmatpush1.msra.mxu0 %v210
    %527 = vmatprep.subr.mxu0 0.0
    %528 = vmatpush1.msra.mxu0 %v209
    %529 = vmatprep.subr.mxu0 0.0
    %530 = vmatpush1.msra.mxu0 %v208
    %531 = vmatprep.subr.mxu0 0.0
    %532 = vmatpush1.msra.mxu0 %v207
    %533 = vmatprep.subr.mxu0 0.0
    %534 = vmatpush1.msra.mxu0 %v206
    %535 = vmatprep.subr.mxu0 0.0
    %536 = vmatpush1.msra.mxu0 %v205
    %537 = vmatprep.subr.mxu0 0.0
    %538 = vmatpush1.msra.mxu0 %v204
    %539 = vmatprep.subr.mxu0 0.0
    %540 = vmatpush1.msra.mxu0 %v203
    %541 = vmatprep.subr.mxu0 0.0
    %542 = vmatpush1.msra.mxu0 %v202
    %543 = vmatprep.subr.mxu0 0.0
    %544 = vmatpush1.msra.mxu0 %v201
    %545 = vmatprep.subr.mxu0 0.0
    %546 = vmatpush1.msra.mxu0 %v200
    %547 = vmatprep.subr.mxu0 0.0
    %548 = vmatpush1.msra.mxu0 %v199
    %549 = vmatprep.subr.mxu0 0.0
    %550 = vmatpush1.msra.mxu0 %v198
    %551 = vmatprep.subr.mxu0 0.0
    %552 = vmatpush2.msra.mxu0 0.0
    %553 = vmatprep.subr.mxu0 0.0
    %554 = vmatpush2.msra.mxu0 0.0
    %555 = vmatprep.subr.mxu0 0.0
    %556 = vmatpush2.msra.mxu0 0.0
    %557 = vmatprep.subr.mxu0 0.0
    %558 = vmatpush2.msra.mxu0 0.0
    %559 = vmatprep.subr.mxu0 0.0
    %560 = vmatpush2.msra.mxu0 0.0
    %561 = vmatprep.subr.mxu0 0.0
    %562 = vmatpush2.msra.mxu0 0.0
    %563 = vmatprep.subr.mxu0 0.0
    %564 = vmatpush2.msra.mxu0 0.0
    %565 = vmatprep.subr.mxu0 0.0
    %566 = vmatpush2.msra.mxu0 0.0
    %567 = vmatprep.subr.mxu0 0.0
    %568 = vmatpush2.msra.mxu0 0.0
    %569 = vmatprep.subr.mxu0 0.0
    %570 = vmatpush2.msra.mxu0 0.0
    %571 = vmatprep.subr.mxu0 0.0
    %572 = vmatpush2.msra.mxu0 0.0
    %573 = vmatprep.subr.mxu0 0.0
    %574 = vmatpush2.msra.mxu0 0.0
    %575 = vmatprep.subr.mxu0 0.0
    %576 = vmatpush2.msra.mxu0 0.0
    %577 = vmatprep.subr.mxu0 0.0
    %578 = vmatpush2.msra.mxu0 0.0
    %579 = vmatprep.subr.mxu0 0.0
    %580 = vmatpush2.msra.mxu0 0.0
    %581 = vmatprep.subr.mxu0 0.0
    %582 = vmatpush2.msra.mxu0 0.0
    %583 = vmatprep.mubr.f32.mxu0 0.0
    %584 = vmatmul.mubr.f32.gmra.mxu0 %v514
    %v585 = vpop.f32.mrf.mxu0
    %v586 = vadd.f32 0.0, %v585
    %v587 = vpop.f32.mrf.mxu0
    %588 = vdwg.mxu0
    %v589 = vadd.f32 %v518, %v586
    %v590 = vtanh.pop %v589
    %s591 = scalar_lea.vmem [#allocation7], 32
    %592 = vst [vmem:[%s591] sm:$0xff] %v590
    %s593 = scalar_lea.vmem [#allocation3], 40
    %v594 = vld [vmem:[%s593] sm:$0xff]
    %595 = vmatprep.subr.mxu0 0.0
    %596 = vmatpush1.msra.mxu0 %v213
    %597 = vmatprep.subr.mxu0 0.0
    %598 = vmatpush1.msra.mxu0 %v212
    %599 = vmatprep.subr.mxu0 0.0
    %600 = vmatpush1.msra.mxu0 %v211
    %601 = vmatprep.subr.mxu0 0.0
    %602 = vmatpush1.msra.mxu0 %v210
    %603 = vmatprep.subr.mxu0 0.0
    %604 = vmatpush1.msra.mxu0 %v209
    %605 = vmatprep.subr.mxu0 0.0
    %606 = vmatpush1.msra.mxu0 %v208
    %607 = vmatprep.subr.mxu0 0.0
    %608 = vmatpush1.msra.mxu0 %v207
    %609 = vmatprep.subr.mxu0 0.0
    %610 = vmatpush1.msra.mxu0 %v206
    %611 = vmatprep.subr.mxu0 0.0
    %612 = vmatpush1.msra.mxu0 %v205
    %613 = vmatprep.subr.mxu0 0.0
    %614 = vmatpush1.msra.mxu0 %v204
    %615 = vmatprep.subr.mxu0 0.0
    %616 = vmatpush1.msra.mxu0 %v203
    %617 = vmatprep.subr.mxu0 0.0
    %618 = vmatpush1.msra.mxu0 %v202
    %619 = vmatprep.subr.mxu0 0.0
    %620 = vmatpush1.msra.mxu0 %v201
    %621 = vmatprep.subr.mxu0 0.0
    %622 = vmatpush1.msra.mxu0 %v200
    %623 = vmatprep.subr.mxu0 0.0
    %624 = vmatpush1.msra.mxu0 %v199
    %625 = vmatprep.subr.mxu0 0.0
    %626 = vmatpush1.msra.mxu0 %v198
    %627 = vmatprep.subr.mxu0 0.0
    %628 = vmatpush2.msra.mxu0 0.0
    %629 = vmatprep.subr.mxu0 0.0
    %630 = vmatpush2.msra.mxu0 0.0
    %631 = vmatprep.subr.mxu0 0.0
    %632 = vmatpush2.msra.mxu0 0.0
    %633 = vmatprep.subr.mxu0 0.0
    %634 = vmatpush2.msra.mxu0 0.0
    %635 = vmatprep.subr.mxu0 0.0
    %636 = vmatpush2.msra.mxu0 0.0
    %637 = vmatprep.subr.mxu0 0.0
    %638 = vmatpush2.msra.mxu0 0.0
    %639 = vmatprep.subr.mxu0 0.0
    %640 = vmatpush2.msra.mxu0 0.0
    %641 = vmatprep.subr.mxu0 0.0
    %642 = vmatpush2.msra.mxu0 0.0
    %643 = vmatprep.subr.mxu0 0.0
    %644 = vmatpush2.msra.mxu0 0.0
    %645 = vmatprep.subr.mxu0 0.0
    %646 = vmatpush2.msra.mxu0 0.0
    %647 = vmatprep.subr.mxu0 0.0
    %648 = vmatpush2.msra.mxu0 0.0
    %649 = vmatprep.subr.mxu0 0.0
    %650 = vmatpush2.msra.mxu0 0.0
    %651 = vmatprep.subr.mxu0 0.0
    %652 = vmatpush2.msra.mxu0 0.0
    %653 = vmatprep.subr.mxu0 0.0
    %654 = vmatpush2.msra.mxu0 0.0
    %655 = vmatprep.subr.mxu0 0.0
    %656 = vmatpush2.msra.mxu0 0.0
    %657 = vmatprep.subr.mxu0 0.0
    %658 = vmatpush2.msra.mxu0 0.0
    %659 = vmatprep.mubr.f32.mxu0 0.0
    %660 = vmatmul.mubr.f32.gmra.mxu0 %v590
    %v661 = vpop.f32.mrf.mxu0
    %v662 = vadd.f32 0.0, %v661
    %v663 = vpop.f32.mrf.mxu0
    %664 = vdwg.mxu0
    %v665 = vadd.f32 %v594, %v662
    %v666 = vtanh.pop %v665
    %s667 = scalar_lea.vmem [#allocation7], 40
    %668 = vst [vmem:[%s667] sm:$0xff] %v666
    %s669 = scalar_lea.vmem [#allocation3], 48
    %v670 = vld [vmem:[%s669] sm:$0xff]
    %671 = vmatprep.subr.mxu0 0.0
    %672 = vmatpush1.msra.mxu0 %v213
    %673 = vmatprep.subr.mxu0 0.0
    %674 = vmatpush1.msra.mxu0 %v212
    %675 = vmatprep.subr.mxu0 0.0
    %676 = vmatpush1.msra.mxu0 %v211
    %677 = vmatprep.subr.mxu0 0.0
    %678 = vmatpush1.msra.mxu0 %v210
    %679 = vmatprep.subr.mxu0 0.0
    %680 = vmatpush1.msra.mxu0 %v209
    %681 = vmatprep.subr.mxu0 0.0
    %682 = vmatpush1.msra.mxu0 %v208
    %683 = vmatprep.subr.mxu0 0.0
    %684 = vmatpush1.msra.mxu0 %v207
    %685 = vmatprep.subr.mxu0 0.0
    %686 = vmatpush1.msra.mxu0 %v206
    %687 = vmatprep.subr.mxu0 0.0
    %688 = vmatpush1.msra.mxu0 %v205
    %689 = vmatprep.subr.mxu0 0.0
    %690 = vmatpush1.msra.mxu0 %v204
    %691 = vmatprep.subr.mxu0 0.0
    %692 = vmatpush1.msra.mxu0 %v203
    %693 = vmatprep.subr.mxu0 0.0
    %694 = vmatpush1.msra.mxu0 %v202
    %695 = vmatprep.subr.mxu0 0.0
    %696 = vmatpush1.msra.mxu0 %v201
    %697 = vmatprep.subr.mxu0 0.0
    %698 = vmatpush1.msra.mxu0 %v200
    %699 = vmatprep.subr.mxu0 0.0
    %700 = vmatpush1.msra.mxu0 %v199
    %701 = vmatprep.subr.mxu0 0.0
    %702 = vmatpush1.msra.mxu0 %v198
    %703 = vmatprep.subr.mxu0 0.0
    %704 = vmatpush2.msra.mxu0 0.0
    %705 = vmatprep.subr.mxu0 0.0
    %706 = vmatpush2.msra.mxu0 0.0
    %707 = vmatprep.subr.mxu0 0.0
    %708 = vmatpush2.msra.mxu0 0.0
    %709 = vmatprep.subr.mxu0 0.0
    %710 = vmatpush2.msra.mxu0 0.0
    %711 = vmatprep.subr.mxu0 0.0
    %712 = vmatpush2.msra.mxu0 0.0
    %713 = vmatprep.subr.mxu0 0.0
    %714 = vmatpush2.msra.mxu0 0.0
    %715 = vmatprep.subr.mxu0 0.0
    %716 = vmatpush2.msra.mxu0 0.0
    %717 = vmatprep.subr.mxu0 0.0
    %718 = vmatpush2.msra.mxu0 0.0
    %719 = vmatprep.subr.mxu0 0.0
    %720 = vmatpush2.msra.mxu0 0.0
    %721 = vmatprep.subr.mxu0 0.0
    %722 = vmatpush2.msra.mxu0 0.0
    %723 = vmatprep.subr.mxu0 0.0
    %724 = vmatpush2.msra.mxu0 0.0
    %725 = vmatprep.subr.mxu0 0.0
    %726 = vmatpush2.msra.mxu0 0.0
    %727 = vmatprep.subr.mxu0 0.0
    %728 = vmatpush2.msra.mxu0 0.0
    %729 = vmatprep.subr.mxu0 0.0
    %730 = vmatpush2.msra.mxu0 0.0
    %731 = vmatprep.subr.mxu0 0.0
    %732 = vmatpush2.msra.mxu0 0.0
    %733 = vmatprep.subr.mxu0 0.0
    %734 = vmatpush2.msra.mxu0 0.0
    %735 = vmatprep.mubr.f32.mxu0 0.0
    %736 = vmatmul.mubr.f32.gmra.mxu0 %v666
    %v737 = vpop.f32.mrf.mxu0
    %v738 = vadd.f32 0.0, %v737
    %v739 = vpop.f32.mrf.mxu0
    %740 = vdwg.mxu0
    %v741 = vadd.f32 %v670, %v738
    %v742 = vtanh.pop %v741
    %s743 = scalar_lea.vmem [#allocation7], 48
    %744 = vst [vmem:[%s743] sm:$0xff] %v742
    %s745 = scalar_lea.vmem [#allocation3], 56
    %v746 = vld [vmem:[%s745] sm:$0xff]
    %747 = vmatprep.subr.mxu0 0.0
    %748 = vmatpush1.msra.mxu0 %v213
    %749 = vmatprep.subr.mxu0 0.0
    %750 = vmatpush1.msra.mxu0 %v212
    %751 = vmatprep.subr.mxu0 0.0
    %752 = vmatpush1.msra.mxu0 %v211
    %753 = vmatprep.subr.mxu0 0.0
    %754 = vmatpush1.msra.mxu0 %v210
    %755 = vmatprep.subr.mxu0 0.0
    %756 = vmatpush1.msra.mxu0 %v209
    %757 = vmatprep.subr.mxu0 0.0
    %758 = vmatpush1.msra.mxu0 %v208
    %759 = vmatprep.subr.mxu0 0.0
    %760 = vmatpush1.msra.mxu0 %v207
    %761 = vmatprep.subr.mxu0 0.0
    %762 = vmatpush1.msra.mxu0 %v206
    %763 = vmatprep.subr.mxu0 0.0
    %764 = vmatpush1.msra.mxu0 %v205
    %765 = vmatprep.subr.mxu0 0.0
    %766 = vmatpush1.msra.mxu0 %v204
    %767 = vmatprep.subr.mxu0 0.0
    %768 = vmatpush1.msra.mxu0 %v203
    %769 = vmatprep.subr.mxu0 0.0
    %770 = vmatpush1.msra.mxu0 %v202
    %771 = vmatprep.subr.mxu0 0.0
    %772 = vmatpush1.msra.mxu0 %v201
    %773 = vmatprep.subr.mxu0 0.0
    %774 = vmatpush1.msra.mxu0 %v200
    %775 = vmatprep.subr.mxu0 0.0
    %776 = vmatpush1.msra.mxu0 %v199
    %777 = vmatprep.subr.mxu0 0.0
    %778 = vmatpush1.msra.mxu0 %v198
    %779 = vmatprep.subr.mxu0 0.0
    %780 = vmatpush2.msra.mxu0 0.0
    %781 = vmatprep.subr.mxu0 0.0
    %782 = vmatpush2.msra.mxu0 0.0
    %783 = vmatprep.subr.mxu0 0.0
    %784 = vmatpush2.msra.mxu0 0.0
    %785 = vmatprep.subr.mxu0 0.0
    %786 = vmatpush2.msra.mxu0 0.0
    %787 = vmatprep.subr.mxu0 0.0
    %788 = vmatpush2.msra.mxu0 0.0
    %789 = vmatprep.subr.mxu0 0.0
    %790 = vmatpush2.msra.mxu0 0.0
    %791 = vmatprep.subr.mxu0 0.0
    %792 = vmatpush2.msra.mxu0 0.0
    %793 = vmatprep.subr.mxu0 0.0
    %794 = vmatpush2.msra.mxu0 0.0
    %795 = vmatprep.subr.mxu0 0.0
    %796 = vmatpush2.msra.mxu0 0.0
    %797 = vmatprep.subr.mxu0 0.0
    %798 = vmatpush2.msra.mxu0 0.0
    %799 = vmatprep.subr.mxu0 0.0
    %800 = vmatpush2.msra.mxu0 0.0
    %801 = vmatprep.subr.mxu0 0.0
    %802 = vmatpush2.msra.mxu0 0.0
    %803 = vmatprep.subr.mxu0 0.0
    %804 = vmatpush2.msra.mxu0 0.0
    %805 = vmatprep.subr.mxu0 0.0
    %806 = vmatpush2.msra.mxu0 0.0
    %807 = vmatprep.subr.mxu0 0.0
    %808 = vmatpush2.msra.mxu0 0.0
    %809 = vmatprep.subr.mxu0 0.0
    %810 = vmatpush2.msra.mxu0 0.0
    %811 = vmatprep.mubr.f32.mxu0 0.0
    %812 = vmatmul.mubr.f32.gmra.mxu0 %v742
    %v813 = vpop.f32.mrf.mxu0
    %v814 = vadd.f32 0.0, %v813
    %v815 = vpop.f32.mrf.mxu0
    %816 = vdwg.mxu0
    %v817 = vadd.f32 %v746, %v814
    %v818 = vtanh.pop %v817
    %s819 = scalar_lea.vmem [#allocation7], 56
    %820 = vst [vmem:[%s819] sm:$0xff] %v818
    %821 = vst [vmem:[#allocation2] sm:$0xff] %v818
    // Predicated region
    $region30: #{tpu_custom_call.1} parent=1 // pred_check
      _
    $region31: #{tpu_custom_call.1} parent=1 // pred_check_branch
      %823 = sbr.rel (0) target = $region33
    $region32: #{tpu_custom_call.1} parent=1 // pred_region
      %s825 = ssub.s32 1024, 1024
      %826 = vsyncadd [#allocation6], %s825
      %s827 = sshll.u32 [#allocation7], 4
      %s828 = int_to_ptr.vmem [resolvable:$true] %s827
      %833 = dma.vmem_to_hbm [thread:$0]  %s828, 1024, %s5, [#allocation6], 128, 128, 8
    $region33: #{tpu_custom_call.1} parent=1 // pred_fallthru
      _
    // Predicated region
    $region34: #{tpu_custom_call.1} parent=1 // pred_check
      _
    $region35: #{tpu_custom_call.1} parent=1 // pred_check_branch
      %835 = sbr.rel (0) target = $region37
    $region36: #{tpu_custom_call.1} parent=1 // pred_region
      %836 = dma.done [#allocation6], 1024
    $region37: #{tpu_custom_call.1} parent=1 // pred_fallthru
      _
    %837 = vsyncpa [#allocation5], 1
    %838 = vsyncpa [#allocation6], 1

// kernel: tpu_custom_call.1
$region0: #{tpu_custom_call.1}
  #allocation0 [shape = 'u32[]', space=smem, size = 0x4, offset = 0x4, fixed_abs, tag = 'smem constant byte address 0x4 - core index']
  #allocation1 [shape = 'u32[144,128]{1,0:T(1,128)}', space=vmem, size = 0x12000, scoped, tag = 'internal scratch']
  #allocation2 [shape = 'f32[8,128]{1,0:T(8,128)}', space=vmem, size = 0x1000, scoped, tag = 'scratch operand']
  #allocation3 [shape = 'f32[64,128]{1,0:T(8,128)}', space=vmem, size = 0x8000, scoped, tag = 'scratch operand']
  %s0 = inlined_call_operand.vmem [shape: f32[64,32], index: 0, kind: input, shape index: {}]
  %s1 = inlined_call_operand.vmem [shape: f32[32,128], index: 1, kind: input, shape index: {}]
  %s2 = inlined_call_operand.hbm [shape: f32[128,128], index: 2, kind: input, shape index: {}]
  %s3 = inlined_call_operand.vmem [shape: f32[1,128], index: 3, kind: input, shape index: {}]
  %s4 = inlined_call_operand.vmem [shape: f32[8,128], index: 4, kind: input, shape index: {}]
  %s5 = inlined_call_operand.hbm [shape: f32[8,8,128], index: 5, kind: output, shape index: {}]
  %s6 = sld [smem:[#allocation0]]
  $region38: #{tpu_custom_call.1} parent=0
    _
  %s8 = ssub.s32 1, %s6
  %s9 = scalar_select 0, %s8, %s6
  $region1: #{tpu_custom_call.1} parent=0
    #allocation4 [shape = 'u8[65536]{0}', space=vmem, size = 0x10000, scoped, tag = 'input window, operand 2, single buffered']
    #allocation5 [shape = 's32[1]{0}', space=sflag, size = 0x4, scoped, tag = 'scoped memory for tpu_custom_call.1']
    #allocation6 [shape = 's32[1]{0}', space=sflag, size = 0x4, scoped, tag = 'scoped memory for tpu_custom_call.1']
    #allocation7 [shape = 'u8[32768]{0}', space=vmem, size = 0x8000, scoped, tag = 'output window, operand 0, single buffered']
    %10 = vsyncpa [#allocation5], 0
    %11 = vsyncpa [#allocation6], 0
    // Predicated region
    $region2: #{tpu_custom_call.1} parent=1 // pred_check
      _
    $region3: #{tpu_custom_call.1} parent=1 // pred_check_branch
      %13 = sbr.rel (0) target = $region5
    $region4: #{tpu_custom_call.1} parent=1 // pred_region
      _
    $region5: #{tpu_custom_call.1} parent=1 // pred_fallthru
      _
    // Predicated region
    $region6: #{tpu_custom_call.1} parent=1 // pred_check
      _
    $region7: #{tpu_custom_call.1} parent=1 // pred_check_branch
      %15 = sbr.rel (0) target = $region9
    $region8: #{tpu_custom_call.1} parent=1 // pred_region
      _
    $region9: #{tpu_custom_call.1} parent=1 // pred_fallthru
      _
    // Predicated region
    $region10: #{tpu_custom_call.1} parent=1 // pred_check
      _
    $region11: #{tpu_custom_call.1} parent=1 // pred_check_branch
      %17 = sbr.rel (0) target = $region13
    $region12: #{tpu_custom_call.1} parent=1 // pred_region
      %s19 = ssub.s32 2048, 2048
      %20 = vsyncadd [#allocation5], %s19
      %s21 = sshll.u32 [#allocation4], 4
      %s22 = int_to_ptr.vmem [resolvable:$true] %s21
      %27 = dma.hbm_to_vmem [thread:$0]  %s2, 2048, %s22, [#allocation5], 128, 128, 8
    $region13: #{tpu_custom_call.1} parent=1 // pred_fallthru
      _
    // Predicated region
    $region14: #{tpu_custom_call.1} parent=1 // pred_check
      _
    $region15: #{tpu_custom_call.1} parent=1 // pred_check_branch
      %29 = sbr.rel (0) target = $region17
    $region16: #{tpu_custom_call.1} parent=1 // pred_region
      _
    $region17: #{tpu_custom_call.1} parent=1 // pred_fallthru
      _
    // Predicated region
    $region18: #{tpu_custom_call.1} parent=1 // pred_check
      _
    $region19: #{tpu_custom_call.1} parent=1 // pred_check_branch
      %31 = sbr.rel (0) target = $region21
    $region20: #{tpu_custom_call.1} parent=1 // pred_region
      _
    $region21: #{tpu_custom_call.1} parent=1 // pred_fallthru
      _
    // Predicated region
    $region22: #{tpu_custom_call.1} parent=1 // pred_check
      _
    $region23: #{tpu_custom_call.1} parent=1 // pred_check_branch
      %33 = sbr.rel (0) target = $region25
    $region24: #{tpu_custom_call.1} parent=1 // pred_region
      %34 = dma.done [#allocation5], 2048
    $region25: #{tpu_custom_call.1} parent=1 // pred_fallthru
      _
    %p35 = scmp.eq.s32.totalorder 0, 0
    // Predicated region
    $region26: #{tpu_custom_call.1} parent=1 // pred_check
      %p36 = pneg %p35
    $region27: #{tpu_custom_call.1} parent=1 // pred_check_branch
      %38 = sbr.rel (%p36) target = $region29
    $region28: #{tpu_custom_call.1} parent=1 // pred_region
      %v39 = vld [vmem:[%s4] sm:$0xff]
      %40 = vst [vmem:[#allocation2] sm:$0xff] %v39
    $region29: #{tpu_custom_call.1} parent=1 // pred_fallthru
      _
    %v41 = vld [vmem:[%s0] sm:$0xff]
    %v42 = vld [vmem:[%s0 + $0x8] sm:$0xff]
    %v43 = vld [vmem:[%s0 + $0x10] sm:$0xff]
    %v44 = vld [vmem:[%s0 + $0x18] sm:$0xff]
    %v45 = vld [vmem:[%s0 + $0x20] sm:$0xff]
    %v46 = vld [vmem:[%s0 + $0x28] sm:$0xff]
    %v47 = vld [vmem:[%s0 + $0x30] sm:$0xff]
    %v48 = vld [vmem:[%s0 + $0x38] sm:$0xff]
    %v49 = vld [vmem:[%s1] sm:$0xff]
    %v50 = vld [vmem:[%s1 + $0x8] sm:$0xff]
    %v51 = vld [vmem:[%s1 + $0x10] sm:$0xff]
    %v52 = vld [vmem:[%s1 + $0x18] sm:$0xff]
    %v53 = vld [vmem:[%s3] sm:$0x1]
    %v55 = vlaneseq
    %v56 = vshrl.u32 %v55, 7
    %v57 = vsub.s32 0, %v56
    %v58 = vrot.slane %v53, %v57
    %vm60 = vcmask 261120
    %v62 = vsel %vm60, %v41, 0
    %v65 = vsel %vm60, %v42, 0
    %v68 = vsel %vm60, %v43, 0
    %v71 = vsel %vm60, %v44, 0
    %v74 = vsel %vm60, %v45, 0
    %v77 = vsel %vm60, %v46, 0
    %v80 = vsel %vm60, %v47, 0
    %v83 = vsel %vm60, %v48, 0
    %85 = vmatprep.subr.mxu0 0.0
    %86 = vmatpush1.msra.mxu0 0.0
    %87 = vmatprep.subr.mxu0 0.0
    %88 = vmatpush1.msra.mxu0 0.0
    %89 = vmatprep.subr.mxu0 0.0
    %90 = vmatpush1.msra.mxu0 0.0
    %91 = vmatprep.subr.mxu0 0.0
    %92 = vmatpush1.msra.mxu0 0.0
    %93 = vmatprep.subr.mxu0 0.0
    %94 = vmatpush1.msra.mxu0 0.0
    %95 = vmatprep.subr.mxu0 0.0
    %96 = vmatpush1.msra.mxu0 0.0
    %97 = vmatprep.subr.mxu0 0.0
    %98 = vmatpush1.msra.mxu0 0.0
    %99 = vmatprep.subr.mxu0 0.0
    %100 = vmatpush1.msra.mxu0 0.0
    %101 = vmatprep.subr.mxu0 0.0
    %102 = vmatpush1.msra.mxu0 0.0
    %103 = vmatprep.subr.mxu0 0.0
    %104 = vmatpush1.msra.mxu0 0.0
    %105 = vmatprep.subr.mxu0 0.0
    %106 = vmatpush1.msra.mxu0 0.0
    %107 = vmatprep.subr.mxu0 0.0
    %108 = vmatpush1.msra.mxu0 0.0
    %109 = vmatprep.subr.mxu0 0.0
    %110 = vmatpush1.msra.mxu0 %v52
    %111 = vmatprep.subr.mxu0 0.0
    %112 = vmatpush1.msra.mxu0 %v51
    %113 = vmatprep.subr.mxu0 0.0
    %114 = vmatpush1.msra.mxu0 %v50
    %115 = vmatprep.subr.mxu0 0.0
    %116 = vmatpush1.msra.mxu0 %v49
    %117 = vmatprep.subr.mxu0 0.0
    %118 = vmatpush2.msra.mxu0 0.0
    %119 = vmatprep.subr.mxu0 0.0
    %120 = vmatpush2.msra.mxu0 0.0
    %121 = vmatprep.subr.mxu0 0.0
    %122 = vmatpush2.msra.mxu0 0.0
    %123 = vmatprep.subr.mxu0 0.0
    %124 = vmatpush2.msra.mxu0 0.0
    %125 = vmatprep.subr.mxu0 0.0
    %126 = vmatpush2.msra.mxu0 0.0
    %127 = vmatprep.subr.mxu0 0.0
    %128 = vmatpush2.msra.mxu0 0.0
    %129 = vmatprep.subr.mxu0 0.0
    %130 = vmatpush2.msra.mxu0 0.0
    %131 = vmatprep.subr.mxu0 0.0
    %132 = vmatpush2.msra.mxu0 0.0
    %133 = vmatprep.subr.mxu0 0.0
    %134 = vmatpush2.msra.mxu0 0.0
    %135 = vmatprep.subr.mxu0 0.0
    %136 = vmatpush2.msra.mxu0 0.0
    %137 = vmatprep.subr.mxu0 0.0
    %138 = vmatpush2.msra.mxu0 0.0
    %139 = vmatprep.subr.mxu0 0.0
    %140 = vmatpush2.msra.mxu0 0.0
    %141 = vmatprep.subr.mxu0 0.0
    %142 = vmatpush2.msra.mxu0 0.0
    %143 = vmatprep.subr.mxu0 0.0
    %144 = vmatpush2.msra.mxu0 0.0
    %145 = vmatprep.subr.mxu0 0.0
    %146 = vmatpush2.msra.mxu0 0.0
    %147 = vmatprep.subr.mxu0 0.0
    %148 = vmatpush2.msra.mxu0 0.0
    %149 = vmatprep.mubr.f32.mxu0 0.0
    %150 = vmatmul.mubr.f32.gmra.mxu0 %v62
    %v151 = vpop.f32.mrf.mxu0
    %v152 = vadd.f32 %v58, %v151
    %v153 = vpop.f32.mrf.mxu0
    %154 = vmatprep.mubr.f32.mxu0 0.0
    %155 = vmatmul.mubr.f32.gmra.mxu0 %v65
    %v156 = vpop.f32.mrf.mxu0
    %v157 = vadd.f32 %v58, %v156
    %v158 = vpop.f32.mrf.mxu0
    %159 = vmatprep.mubr.f32.mxu0 0.0
    %160 = vmatmul.mubr.f32.gmra.mxu0 %v68
    %v161 = vpop.f32.mrf.mxu0
    %v162 = vadd.f32 %v58, %v161
    %v163 = vpop.f32.mrf.mxu0
    %164 = vmatprep.mubr.f32.mxu0 0.0
    %165 = vmatmul.mubr.f32.gmra.mxu0 %v71
    %v166 = vpop.f32.mrf.mxu0
    %v167 = vadd.f32 %v58, %v166
    %v168 = vpop.f32.mrf.mxu0
    %169 = vmatprep.mubr.f32.mxu0 0.0
    %170 = vmatmul.mubr.f32.gmra.mxu0 %v74
    %v171 = vpop.f32.mrf.mxu0
    %v172 = vadd.f32 %v58, %v171
    %v173 = vpop.f32.mrf.mxu0
    %174 = vmatprep.mubr.f32.mxu0 0.0
    %175 = vmatmul.mubr.f32.gmra.mxu0 %v77
    %v176 = vpop.f32.mrf.mxu0
    %v177 = vadd.f32 %v58, %v176
    %v178 = vpop.f32.mrf.mxu0
    %179 = vmatprep.mubr.f32.mxu0 0.0
    %180 = vmatmul.mubr.f32.gmra.mxu0 %v80
    %v181 = vpop.f32.mrf.mxu0
    %v182 = vadd.f32 %v58, %v181
    %v183 = vpop.f32.mrf.mxu0
    %184 = vmatprep.mubr.f32.mxu0 0.0
    %185 = vmatmul.mubr.f32.gmra.mxu0 %v83
    %v186 = vpop.f32.mrf.mxu0
    %v187 = vadd.f32 %v58, %v186
    %v188 = vpop.f32.mrf.mxu0
    %189 = vdwg.mxu0
    %190 = vst [vmem:[#allocation3] sm:$0xff] %v152
    %191 = vst [vmem:[#allocation3 + $0x8] sm:$0xff] %v157
    %192 = vst [vmem:[#allocation3 + $0x10] sm:$0xff] %v162
    %193 = vst [vmem:[#allocation3 + $0x18] sm:$0xff] %v167
    %194 = vst [vmem:[#allocation3 + $0x20] sm:$0xff] %v172
    %195 = vst [vmem:[#allocation3 + $0x28] sm:$0xff] %v177
    %196 = vst [vmem:[#allocation3 + $0x30] sm:$0xff] %v182
    %197 = vst [vmem:[#allocation3 + $0x38] sm:$0xff] %v187
    %v198 = vld [vmem:[#allocation4] sm:$0xff]
    %v199 = vld [vmem:[#allocation4 + $0x8] sm:$0xff]
    %v200 = vld [vmem:[#allocation4 + $0x10] sm:$0xff]
    %v201 = vld [vmem:[#allocation4 + $0x18] sm:$0xff]
    %v202 = vld [vmem:[#allocation4 + $0x20] sm:$0xff]
    %v203 = vld [vmem:[#allocation4 + $0x28] sm:$0xff]
    %v204 = vld [vmem:[#allocation4 + $0x30] sm:$0xff]
    %v205 = vld [vmem:[#allocation4 + $0x38] sm:$0xff]
    %v206 = vld [vmem:[#allocation4 + $0x40] sm:$0xff]
    %v207 = vld [vmem:[#allocation4 + $0x48] sm:$0xff]
    %v208 = vld [vmem:[#allocation4 + $0x50] sm:$0xff]
    %v209 = vld [vmem:[#allocation4 + $0x58] sm:$0xff]
    %v210 = vld [vmem:[#allocation4 + $0x60] sm:$0xff]
    %v211 = vld [vmem:[#allocation4 + $0x68] sm:$0xff]
    %v212 = vld [vmem:[#allocation4 + $0x70] sm:$0xff]
    %v213 = vld [vmem:[#allocation4 + $0x78] sm:$0xff]
    %v214 = vld [vmem:[#allocation2] sm:$0xff]
    %v215 = vld [vmem:[#allocation3] sm:$0xff]
    %216 = vmatprep.subr.mxu0 0.0
    %217 = vmatpush1.msra.mxu0 %v213
    %218 = vmatprep.subr.mxu0 0.0
    %219 = vmatpush1.msra.mxu0 %v212
    %220 = vmatprep.subr.mxu0 0.0
    %221 = vmatpush1.msra.mxu0 %v211
    %222 = vmatprep.subr.mxu0 0.0
    %223 = vmatpush1.msra.mxu0 %v210
    %224 = vmatprep.subr.mxu0 0.0
    %225 = vmatpush1.msra.mxu0 %v209
    %226 = vmatprep.subr.mxu0 0.0
    %227 = vmatpush1.msra.mxu0 %v208
    %228 = vmatprep.subr.mxu0 0.0
    %229 = vmatpush1.msra.mxu0 %v207
    %230 = vmatprep.subr.mxu0 0.0
    %231 = vmatpush1.msra.mxu0 %v206
    %232 = vmatprep.subr.mxu0 0.0
    %233 = vmatpush1.msra.mxu0 %v205
    %234 = vmatprep.subr.mxu0 0.0
    %235 = vmatpush1.msra.mxu0 %v204
    %236 = vmatprep.subr.mxu0 0.0
    %237 = vmatpush1.msra.mxu0 %v203
    %238 = vmatprep.subr.mxu0 0.0
    %239 = vmatpush1.msra.mxu0 %v202
    %240 = vmatprep.subr.mxu0 0.0
    %241 = vmatpush1.msra.mxu0 %v201
    %242 = vmatprep.subr.mxu0 0.0
    %243 = vmatpush1.msra.mxu0 %v200
    %244 = vmatprep.subr.mxu0 0.0
    %245 = vmatpush1.msra.mxu0 %v199
    %246 = vmatprep.subr.mxu0 0.0
    %247 = vmatpush1.msra.mxu0 %v198
    %248 = vmatprep.subr.mxu0 0.0
    %249 = vmatpush2.msra.mxu0 0.0
    %250 = vmatprep.subr.mxu0 0.0
    %251 = vmatpush2.msra.mxu0 0.0
    %252 = vmatprep.subr.mxu0 0.0
    %253 = vmatpush2.msra.mxu0 0.0
    %254 = vmatprep.subr.mxu0 0.0
    %255 = vmatpush2.msra.mxu0 0.0
    %256 = vmatprep.subr.mxu0 0.0
    %257 = vmatpush2.msra.mxu0 0.0
    %258 = vmatprep.subr.mxu0 0.0
    %259 = vmatpush2.msra.mxu0 0.0
    %260 = vmatprep.subr.mxu0 0.0
    %261 = vmatpush2.msra.mxu0 0.0
    %262 = vmatprep.subr.mxu0 0.0
    %263 = vmatpush2.msra.mxu0 0.0
    %264 = vmatprep.subr.mxu0 0.0
    %265 = vmatpush2.msra.mxu0 0.0
    %266 = vmatprep.subr.mxu0 0.0
    %267 = vmatpush2.msra.mxu0 0.0
    %268 = vmatprep.subr.mxu0 0.0
    %269 = vmatpush2.msra.mxu0 0.0
    %270 = vmatprep.subr.mxu0 0.0
    %271 = vmatpush2.msra.mxu0 0.0
    %272 = vmatprep.subr.mxu0 0.0
    %273 = vmatpush2.msra.mxu0 0.0
    %274 = vmatprep.subr.mxu0 0.0
    %275 = vmatpush2.msra.mxu0 0.0
    %276 = vmatprep.subr.mxu0 0.0
    %277 = vmatpush2.msra.mxu0 0.0
    %278 = vmatprep.subr.mxu0 0.0
    %279 = vmatpush2.msra.mxu0 0.0
    %280 = vmatprep.mubr.f32.mxu0 0.0
    %281 = vmatmul.mubr.f32.gmra.mxu0 %v214
    %v282 = vpop.f32.mrf.mxu0
    %v283 = vadd.f32 0.0, %v282
    %v284 = vpop.f32.mrf.mxu0
    %285 = vdwg.mxu0
    %v286 = vadd.f32 %v215, %v283
    %v287 = vtanh.pop %v286
    %288 = vst [vmem:[#allocation7] sm:$0xff] %v287
    %s289 = scalar_lea.vmem [#allocation3], 8
    %v290 = vld [vmem:[%s289] sm:$0xff]
    %291 = vmatprep.subr.mxu0 0.0
    %292 = vmatpush1.msra.mxu0 %v213
    %293 = vmatprep.subr.mxu0 0.0
    %294 = vmatpush1.msra.mxu0 %v212
    %295 = vmatprep.subr.mxu0 0.0
    %296 = vmatpush1.msra.mxu0 %v211
    %297 = vmatprep.subr.mxu0 0.0
    %298 = vmatpush1.msra.mxu0 %v210
    %299 = vmatprep.subr.mxu0 0.0
    %300 = vmatpush1.msra.mxu0 %v209
    %301 = vmatprep.subr.mxu0 0.0
    %302 = vmatpush1.msra.mxu0 %v208
    %303 = vmatprep.subr.mxu0 0.0
    %304 = vmatpush1.msra.mxu0 %v207
    %305 = vmatprep.subr.mxu0 0.0
    %306 = vmatpush1.msra.mxu0 %v206
    %307 = vmatprep.subr.mxu0 0.0
    %308 = vmatpush1.msra.mxu0 %v205
    %309 = vmatprep.subr.mxu0 0.0
    %310 = vmatpush1.msra.mxu0 %v204
    %311 = vmatprep.subr.mxu0 0.0
    %312 = vmatpush1.msra.mxu0 %v203
    %313 = vmatprep.subr.mxu0 0.0
    %314 = vmatpush1.msra.mxu0 %v202
    %315 = vmatprep.subr.mxu0 0.0
    %316 = vmatpush1.msra.mxu0 %v201
    %317 = vmatprep.subr.mxu0 0.0
    %318 = vmatpush1.msra.mxu0 %v200
    %319 = vmatprep.subr.mxu0 0.0
    %320 = vmatpush1.msra.mxu0 %v199
    %321 = vmatprep.subr.mxu0 0.0
    %322 = vmatpush1.msra.mxu0 %v198
    %323 = vmatprep.subr.mxu0 0.0
    %324 = vmatpush2.msra.mxu0 0.0
    %325 = vmatprep.subr.mxu0 0.0
    %326 = vmatpush2.msra.mxu0 0.0
    %327 = vmatprep.subr.mxu0 0.0
    %328 = vmatpush2.msra.mxu0 0.0
    %329 = vmatprep.subr.mxu0 0.0
    %330 = vmatpush2.msra.mxu0 0.0
    %331 = vmatprep.subr.mxu0 0.0
    %332 = vmatpush2.msra.mxu0 0.0
    %333 = vmatprep.subr.mxu0 0.0
    %334 = vmatpush2.msra.mxu0 0.0
    %335 = vmatprep.subr.mxu0 0.0
    %336 = vmatpush2.msra.mxu0 0.0
    %337 = vmatprep.subr.mxu0 0.0
    %338 = vmatpush2.msra.mxu0 0.0
    %339 = vmatprep.subr.mxu0 0.0
    %340 = vmatpush2.msra.mxu0 0.0
    %341 = vmatprep.subr.mxu0 0.0
    %342 = vmatpush2.msra.mxu0 0.0
    %343 = vmatprep.subr.mxu0 0.0
    %344 = vmatpush2.msra.mxu0 0.0
    %345 = vmatprep.subr.mxu0 0.0
    %346 = vmatpush2.msra.mxu0 0.0
    %347 = vmatprep.subr.mxu0 0.0
    %348 = vmatpush2.msra.mxu0 0.0
    %349 = vmatprep.subr.mxu0 0.0
    %350 = vmatpush2.msra.mxu0 0.0
    %351 = vmatprep.subr.mxu0 0.0
    %352 = vmatpush2.msra.mxu0 0.0
    %353 = vmatprep.subr.mxu0 0.0
    %354 = vmatpush2.msra.mxu0 0.0
    %355 = vmatprep.mubr.f32.mxu0 0.0
    %356 = vmatmul.mubr.f32.gmra.mxu0 %v287
    %v357 = vpop.f32.mrf.mxu0
    %v358 = vadd.f32 0.0, %v357
    %v359 = vpop.f32.mrf.mxu0
    %360 = vdwg.mxu0
    %v361 = vadd.f32 %v290, %v358
    %v362 = vtanh.pop %v361
    %s363 = scalar_lea.vmem [#allocation7], 8
    %364 = vst [vmem:[%s363] sm:$0xff] %v362
    %s365 = scalar_lea.vmem [#allocation3], 16
    %v366 = vld [vmem:[%s365] sm:$0xff]
    %367 = vmatprep.subr.mxu0 0.0
    %368 = vmatpush1.msra.mxu0 %v213
    %369 = vmatprep.subr.mxu0 0.0
    %370 = vmatpush1.msra.mxu0 %v212
    %371 = vmatprep.subr.mxu0 0.0
    %372 = vmatpush1.msra.mxu0 %v211
    %373 = vmatprep.subr.mxu0 0.0
    %374 = vmatpush1.msra.mxu0 %v210
    %375 = vmatprep.subr.mxu0 0.0
    %376 = vmatpush1.msra.mxu0 %v209
    %377 = vmatprep.subr.mxu0 0.0
    %378 = vmatpush1.msra.mxu0 %v208
    %379 = vmatprep.subr.mxu0 0.0
    %380 = vmatpush1.msra.mxu0 %v207
    %381 = vmatprep.subr.mxu0 0.0
    %382 = vmatpush1.msra.mxu0 %v206
    %383 = vmatprep.subr.mxu0 0.0
    %384 = vmatpush1.msra.mxu0 %v205
    %385 = vmatprep.subr.mxu0 0.0
    %386 = vmatpush1.msra.mxu0 %v204
    %387 = vmatprep.subr.mxu0 0.0
    %388 = vmatpush1.msra.mxu0 %v203
    %389 = vmatprep.subr.mxu0 0.0
    %390 = vmatpush1.msra.mxu0 %v202
    %391 = vmatprep.subr.mxu0 0.0
    %392 = vmatpush1.msra.mxu0 %v201
    %393 = vmatprep.subr.mxu0 0.0
    %394 = vmatpush1.msra.mxu0 %v200
    %395 = vmatprep.subr.mxu0 0.0
    %396 = vmatpush1.msra.mxu0 %v199
    %397 = vmatprep.subr.mxu0 0.0
    %398 = vmatpush1.msra.mxu0 %v198
    %399 = vmatprep.subr.mxu0 0.0
    %400 = vmatpush2.msra.mxu0 0.0
    %401 = vmatprep.subr.mxu0 0.0
    %402 = vmatpush2.msra.mxu0 0.0
    %403 = vmatprep.subr.mxu0 0.0
    %404 = vmatpush2.msra.mxu0 0.0
    %405 = vmatprep.subr.mxu0 0.0
    %406 = vmatpush2.msra.mxu0 0.0
    %407 = vmatprep.subr.mxu0 0.0
    %408 = vmatpush2.msra.mxu0 0.0
    %409 = vmatprep.subr.mxu0 0.0
    %410 = vmatpush2.msra.mxu0 0.0
    %411 = vmatprep.subr.mxu0 0.0
    %412 = vmatpush2.msra.mxu0 0.0
    %413 = vmatprep.subr.mxu0 0.0
    %414 = vmatpush2.msra.mxu0 0.0
    %415 = vmatprep.subr.mxu0 0.0
    %416 = vmatpush2.msra.mxu0 0.0
    %417 = vmatprep.subr.mxu0 0.0
    %418 = vmatpush2.msra.mxu0 0.0
    %419 = vmatprep.subr.mxu0 0.0
    %420 = vmatpush2.msra.mxu0 0.0
    %421 = vmatprep.subr.mxu0 0.0
    %422 = vmatpush2.msra.mxu0 0.0
    %423 = vmatprep.subr.mxu0 0.0
    %424 = vmatpush2.msra.mxu0 0.0
    %425 = vmatprep.subr.mxu0 0.0
    %426 = vmatpush2.msra.mxu0 0.0
    %427 = vmatprep.subr.mxu0 0.0
    %428 = vmatpush2.msra.mxu0 0.0
    %429 = vmatprep.subr.mxu0 0.0
    %430 = vmatpush2.msra.mxu0 0.0
    %431 = vmatprep.mubr.f32.mxu0 0.0
    %432 = vmatmul.mubr.f32.gmra.mxu0 %v362
    %v433 = vpop.f32.mrf.mxu0
    %v434 = vadd.f32 0.0, %v433
    %v435 = vpop.f32.mrf.mxu0
    %436 = vdwg.mxu0
    %v437 = vadd.f32 %v366, %v434
    %v438 = vtanh.pop %v437
    %s439 = scalar_lea.vmem [#allocation7], 16
    %440 = vst [vmem:[%s439] sm:$0xff] %v438
    %s441 = scalar_lea.vmem [#allocation3], 24
    %v442 = vld [vmem:[%s441] sm:$0xff]
    %443 = vmatprep.subr.mxu0 0.0
    %444 = vmatpush1.msra.mxu0 %v213
    %445 = vmatprep.subr.mxu0 0.0
    %446 = vmatpush1.msra.mxu0 %v212
    %447 = vmatprep.subr.mxu0 0.0
    %448 = vmatpush1.msra.mxu0 %v211
    %449 = vmatprep.subr.mxu0 0.0
    %450 = vmatpush1.msra.mxu0 %v210
    %451 = vmatprep.subr.mxu0 0.0
    %452 = vmatpush1.msra.mxu0 %v209
    %453 = vmatprep.subr.mxu0 0.0
    %454 = vmatpush1.msra.mxu0 %v208
    %455 = vmatprep.subr.mxu0 0.0
    %456 = vmatpush1.msra.mxu0 %v207
    %457 = vmatprep.subr.mxu0 0.0
    %458 = vmatpush1.msra.mxu0 %v206
    %459 = vmatprep.subr.mxu0 0.0
    %460 = vmatpush1.msra.mxu0 %v205
    %461 = vmatprep.subr.mxu0 0.0
    %462 = vmatpush1.msra.mxu0 %v204
    %463 = vmatprep.subr.mxu0 0.0
    %464 = vmatpush1.msra.mxu0 %v203
    %465 = vmatprep.subr.mxu0 0.0
    %466 = vmatpush1.msra.mxu0 %v202
    %467 = vmatprep.subr.mxu0 0.0
    %468 = vmatpush1.msra.mxu0 %v201
    %469 = vmatprep.subr.mxu0 0.0
    %470 = vmatpush1.msra.mxu0 %v200
    %471 = vmatprep.subr.mxu0 0.0
    %472 = vmatpush1.msra.mxu0 %v199
    %473 = vmatprep.subr.mxu0 0.0
    %474 = vmatpush1.msra.mxu0 %v198
    %475 = vmatprep.subr.mxu0 0.0
    %476 = vmatpush2.msra.mxu0 0.0
    %477 = vmatprep.subr.mxu0 0.0
    %478 = vmatpush2.msra.mxu0 0.0
    %479 = vmatprep.subr.mxu0 0.0
    %480 = vmatpush2.msra.mxu0 0.0
    %481 = vmatprep.subr.mxu0 0.0
    %482 = vmatpush2.msra.mxu0 0.0
    %483 = vmatprep.subr.mxu0 0.0
    %484 = vmatpush2.msra.mxu0 0.0
    %485 = vmatprep.subr.mxu0 0.0
    %486 = vmatpush2.msra.mxu0 0.0
    %487 = vmatprep.subr.mxu0 0.0
    %488 = vmatpush2.msra.mxu0 0.0
    %489 = vmatprep.subr.mxu0 0.0
    %490 = vmatpush2.msra.mxu0 0.0
    %491 = vmatprep.subr.mxu0 0.0
    %492 = vmatpush2.msra.mxu0 0.0
    %493 = vmatprep.subr.mxu0 0.0
    %494 = vmatpush2.msra.mxu0 0.0
    %495 = vmatprep.subr.mxu0 0.0
    %496 = vmatpush2.msra.mxu0 0.0
    %497 = vmatprep.subr.mxu0 0.0
    %498 = vmatpush2.msra.mxu0 0.0
    %499 = vmatprep.subr.mxu0 0.0
    %500 = vmatpush2.msra.mxu0 0.0
    %501 = vmatprep.subr.mxu0 0.0
    %502 = vmatpush2.msra.mxu0 0.0
    %503 = vmatprep.subr.mxu0 0.0
    %504 = vmatpush2.msra.mxu0 0.0
    %505 = vmatprep.subr.mxu0 0.0
    %506 = vmatpush2.msra.mxu0 0.0
    %507 = vmatprep.mubr.f32.mxu0 0.0
    %508 = vmatmul.mubr.f32.gmra.mxu0 %v438
    %v509 = vpop.f32.mrf.mxu0
    %v510 = vadd.f32 0.0, %v509
    %v511 = vpop.f32.mrf.mxu0
    %512 = vdwg.mxu0
    %v513 = vadd.f32 %v442, %v510
    %v514 = vtanh.pop %v513
    %s515 = scalar_lea.vmem [#allocation7], 24
    %516 = vst [vmem:[%s515] sm:$0xff] %v514
    %s517 = scalar_lea.vmem [#allocation3], 32
    %v518 = vld [vmem:[%s517] sm:$0xff]
    %519 = vmatprep.subr.mxu0 0.0
    %520 = vmatpush1.msra.mxu0 %v213
    %521 = vmatprep.subr.mxu0 0.0
    %522 = vmatpush1.msra.mxu0 %v212
    %523 = vmatprep.subr.mxu0 0.0
    %524 = vmatpush1.msra.mxu0 %v211
    %525 = vmatprep.subr.mxu0 0.0
    %526 = vmatpush1.msra.mxu0 %v210
    %527 = vmatprep.subr.mxu0 0.0
    %528 = vmatpush1.msra.mxu0 %v209
    %529 = vmatprep.subr.mxu0 0.0
    %530 = vmatpush1.msra.mxu0 %v208
    %531 = vmatprep.subr.mxu0 0.0
    %532 = vmatpush1.msra.mxu0 %v207
    %533 = vmatprep.subr.mxu0 0.0
    %534 = vmatpush1.msra.mxu0 %v206
    %535 = vmatprep.subr.mxu0 0.0
    %536 = vmatpush1.msra.mxu0 %v205
    %537 = vmatprep.subr.mxu0 0.0
    %538 = vmatpush1.msra.mxu0 %v204
    %539 = vmatprep.subr.mxu0 0.0
    %540 = vmatpush1.msra.mxu0 %v203
    %541 = vmatprep.subr.mxu0 0.0
    %542 = vmatpush1.msra.mxu0 %v202
    %543 = vmatprep.subr.mxu0 0.0
    %544 = vmatpush1.msra.mxu0 %v201
    %545 = vmatprep.subr.mxu0 0.0
    %546 = vmatpush1.msra.mxu0 %v200
    %547 = vmatprep.subr.mxu0 0.0
    %548 = vmatpush1.msra.mxu0 %v199
    %549 = vmatprep.subr.mxu0 0.0
    %550 = vmatpush1.msra.mxu0 %v198
    %551 = vmatprep.subr.mxu0 0.0
    %552 = vmatpush2.msra.mxu0 0.0
    %553 = vmatprep.subr.mxu0 0.0
    %554 = vmatpush2.msra.mxu0 0.0
    %555 = vmatprep.subr.mxu0 0.0
    %556 = vmatpush2.msra.mxu0 0.0
    %557 = vmatprep.subr.mxu0 0.0
    %558 = vmatpush2.msra.mxu0 0.0
    %559 = vmatprep.subr.mxu0 0.0
    %560 = vmatpush2.msra.mxu0 0.0
    %561 = vmatprep.subr.mxu0 0.0
    %562 = vmatpush2.msra.mxu0 0.0
    %563 = vmatprep.subr.mxu0 0.0
    %564 = vmatpush2.msra.mxu0 0.0
    %565 = vmatprep.subr.mxu0 0.0
    %566 = vmatpush2.msra.mxu0 0.0
    %567 = vmatprep.subr.mxu0 0.0
    %568 = vmatpush2.msra.mxu0 0.0
    %569 = vmatprep.subr.mxu0 0.0
    %570 = vmatpush2.msra.mxu0 0.0
    %571 = vmatprep.subr.mxu0 0.0
    %572 = vmatpush2.msra.mxu0 0.0
    %573 = vmatprep.subr.mxu0 0.0
    %574 = vmatpush2.msra.mxu0 0.0
    %575 = vmatprep.subr.mxu0 0.0
    %576 = vmatpush2.msra.mxu0 0.0
    %577 = vmatprep.subr.mxu0 0.0
    %578 = vmatpush2.msra.mxu0 0.0
    %579 = vmatprep.subr.mxu0 0.0
    %580 = vmatpush2.msra.mxu0 0.0
    %581 = vmatprep.subr.mxu0 0.0
    %582 = vmatpush2.msra.mxu0 0.0
    %583 = vmatprep.mubr.f32.mxu0 0.0
    %584 = vmatmul.mubr.f32.gmra.mxu0 %v514
    %v585 = vpop.f32.mrf.mxu0
    %v586 = vadd.f32 0.0, %v585
    %v587 = vpop.f32.mrf.mxu0
    %588 = vdwg.mxu0
    %v589 = vadd.f32 %v518, %v586
    %v590 = vtanh.pop %v589
    %s591 = scalar_lea.vmem [#allocation7], 32
    %592 = vst [vmem:[%s591] sm:$0xff] %v590
    %s593 = scalar_lea.vmem [#allocation3], 40
    %v594 = vld [vmem:[%s593] sm:$0xff]
    %595 = vmatprep.subr.mxu0 0.0
    %596 = vmatpush1.msra.mxu0 %v213
    %597 = vmatprep.subr.mxu0 0.0
    %598 = vmatpush1.msra.mxu0 %v212
    %599 = vmatprep.subr.mxu0 0.0
    %600 = vmatpush1.msra.mxu0 %v211
    %601 = vmatprep.subr.mxu0 0.0
    %602 = vmatpush1.msra.mxu0 %v210
    %603 = vmatprep.subr.mxu0 0.0
    %604 = vmatpush1.msra.mxu0 %v209
    %605 = vmatprep.subr.mxu0 0.0
    %606 = vmatpush1.msra.mxu0 %v208
    %607 = vmatprep.subr.mxu0 0.0
    %608 = vmatpush1.msra.mxu0 %v207
    %609 = vmatprep.subr.mxu0 0.0
    %610 = vmatpush1.msra.mxu0 %v206
    %611 = vmatprep.subr.mxu0 0.0
    %612 = vmatpush1.msra.mxu0 %v205
    %613 = vmatprep.subr.mxu0 0.0
    %614 = vmatpush1.msra.mxu0 %v204
    %615 = vmatprep.subr.mxu0 0.0
    %616 = vmatpush1.msra.mxu0 %v203
    %617 = vmatprep.subr.mxu0 0.0
    %618 = vmatpush1.msra.mxu0 %v202
    %619 = vmatprep.subr.mxu0 0.0
    %620 = vmatpush1.msra.mxu0 %v201
    %621 = vmatprep.subr.mxu0 0.0
    %622 = vmatpush1.msra.mxu0 %v200
    %623 = vmatprep.subr.mxu0 0.0
    %624 = vmatpush1.msra.mxu0 %v199
    %625 = vmatprep.subr.mxu0 0.0
    %626 = vmatpush1.msra.mxu0 %v198
    %627 = vmatprep.subr.mxu0 0.0
    %628 = vmatpush2.msra.mxu0 0.0
    %629 = vmatprep.subr.mxu0 0.0
    %630 = vmatpush2.msra.mxu0 0.0
    %631 = vmatprep.subr.mxu0 0.0
    %632 = vmatpush2.msra.mxu0 0.0
    %633 = vmatprep.subr.mxu0 0.0
    %634 = vmatpush2.msra.mxu0 0.0
    %635 = vmatprep.subr.mxu0 0.0
    %636 = vmatpush2.msra.mxu0 0.0
    %637 = vmatprep.subr.mxu0 0.0
    %638 = vmatpush2.msra.mxu0 0.0
    %639 = vmatprep.subr.mxu0 0.0
    %640 = vmatpush2.msra.mxu0 0.0
    %641 = vmatprep.subr.mxu0 0.0
    %642 = vmatpush2.msra.mxu0 0.0
    %643 = vmatprep.subr.mxu0 0.0
    %644 = vmatpush2.msra.mxu0 0.0
    %645 = vmatprep.subr.mxu0 0.0
    %646 = vmatpush2.msra.mxu0 0.0
    %647 = vmatprep.subr.mxu0 0.0
    %648 = vmatpush2.msra.mxu0 0.0
    %649 = vmatprep.subr.mxu0 0.0
    %650 = vmatpush2.msra.mxu0 0.0
    %651 = vmatprep.subr.mxu0 0.0
    %652 = vmatpush2.msra.mxu0 0.0
    %653 = vmatprep.subr.mxu0 0.0
    %654 = vmatpush2.msra.mxu0 0.0
    %655 = vmatprep.subr.mxu0 0.0
    %656 = vmatpush2.msra.mxu0 0.0
    %657 = vmatprep.subr.mxu0 0.0
    %658 = vmatpush2.msra.mxu0 0.0
    %659 = vmatprep.mubr.f32.mxu0 0.0
    %660 = vmatmul.mubr.f32.gmra.mxu0 %v590
    %v661 = vpop.f32.mrf.mxu0
    %v662 = vadd.f32 0.0, %v661
    %v663 = vpop.f32.mrf.mxu0
    %664 = vdwg.mxu0
    %v665 = vadd.f32 %v594, %v662
    %v666 = vtanh.pop %v665
    %s667 = scalar_lea.vmem [#allocation7], 40
    %668 = vst [vmem:[%s667] sm:$0xff] %v666
    %s669 = scalar_lea.vmem [#allocation3], 48
    %v670 = vld [vmem:[%s669] sm:$0xff]
    %671 = vmatprep.subr.mxu0 0.0
    %672 = vmatpush1.msra.mxu0 %v213
    %673 = vmatprep.subr.mxu0 0.0
    %674 = vmatpush1.msra.mxu0 %v212
    %675 = vmatprep.subr.mxu0 0.0
    %676 = vmatpush1.msra.mxu0 %v211
    %677 = vmatprep.subr.mxu0 0.0
    %678 = vmatpush1.msra.mxu0 %v210
    %679 = vmatprep.subr.mxu0 0.0
    %680 = vmatpush1.msra.mxu0 %v209
    %681 = vmatprep.subr.mxu0 0.0
    %682 = vmatpush1.msra.mxu0 %v208
    %683 = vmatprep.subr.mxu0 0.0
    %684 = vmatpush1.msra.mxu0 %v207
    %685 = vmatprep.subr.mxu0 0.0
    %686 = vmatpush1.msra.mxu0 %v206
    %687 = vmatprep.subr.mxu0 0.0
    %688 = vmatpush1.msra.mxu0 %v205
    %689 = vmatprep.subr.mxu0 0.0
    %690 = vmatpush1.msra.mxu0 %v204
    %691 = vmatprep.subr.mxu0 0.0
    %692 = vmatpush1.msra.mxu0 %v203
    %693 = vmatprep.subr.mxu0 0.0
    %694 = vmatpush1.msra.mxu0 %v202
    %695 = vmatprep.subr.mxu0 0.0
    %696 = vmatpush1.msra.mxu0 %v201
    %697 = vmatprep.subr.mxu0 0.0
    %698 = vmatpush1.msra.mxu0 %v200
    %699 = vmatprep.subr.mxu0 0.0
    %700 = vmatpush1.msra.mxu0 %v199
    %701 = vmatprep.subr.mxu0 0.0
    %702 = vmatpush1.msra.mxu0 %v198
    %703 = vmatprep.subr.mxu0 0.0
    %704 = vmatpush2.msra.mxu0 0.0
    %705 = vmatprep.subr.mxu0 0.0
    %706 = vmatpush2.msra.mxu0 0.0
    %707 = vmatprep.subr.mxu0 0.0
    %708 = vmatpush2.msra.mxu0 0.0
    %709 = vmatprep.subr.mxu0 0.0
    %710 = vmatpush2.msra.mxu0 0.0
    %711 = vmatprep.subr.mxu0 0.0
    %712 = vmatpush2.msra.mxu0 0.0
    %713 = vmatprep.subr.mxu0 0.0
    %714 = vmatpush2.msra.mxu0 0.0
    %715 = vmatprep.subr.mxu0 0.0
    %716 = vmatpush2.msra.mxu0 0.0
    %717 = vmatprep.subr.mxu0 0.0
    %718 = vmatpush2.msra.mxu0 0.0
    %719 = vmatprep.subr.mxu0 0.0
    %720 = vmatpush2.msra.mxu0 0.0
    %721 = vmatprep.subr.mxu0 0.0
    %722 = vmatpush2.msra.mxu0 0.0
    %723 = vmatprep.subr.mxu0 0.0
    %724 = vmatpush2.msra.mxu0 0.0
    %725 = vmatprep.subr.mxu0 0.0
    %726 = vmatpush2.msra.mxu0 0.0
    %727 = vmatprep.subr.mxu0 0.0
    %728 = vmatpush2.msra.mxu0 0.0
    %729 = vmatprep.subr.mxu0 0.0
    %730 = vmatpush2.msra.mxu0 0.0
    %731 = vmatprep.subr.mxu0 0.0
    %732 = vmatpush2.msra.mxu0 0.0
    %733 = vmatprep.subr.mxu0 0.0
    %734 = vmatpush2.msra.mxu0 0.0
    %735 = vmatprep.mubr.f32.mxu0 0.0
    %736 = vmatmul.mubr.f32.gmra.mxu0 %v666
    %v737 = vpop.f32.mrf.mxu0
    %v738 = vadd.f32 0.0, %v737
    %v739 = vpop.f32.mrf.mxu0
    %740 = vdwg.mxu0
    %v741 = vadd.f32 %v670, %v738
    %v742 = vtanh.pop %v741
    %s743 = scalar_lea.vmem [#allocation7], 48
    %744 = vst [vmem:[%s743] sm:$0xff] %v742
    %s745 = scalar_lea.vmem [#allocation3], 56
    %v746 = vld [vmem:[%s745] sm:$0xff]
    %747 = vmatprep.subr.mxu0 0.0
    %748 = vmatpush1.msra.mxu0 %v213
    %749 = vmatprep.subr.mxu0 0.0
    %750 = vmatpush1.msra.mxu0 %v212
    %751 = vmatprep.subr.mxu0 0.0
    %752 = vmatpush1.msra.mxu0 %v211
    %753 = vmatprep.subr.mxu0 0.0
    %754 = vmatpush1.msra.mxu0 %v210
    %755 = vmatprep.subr.mxu0 0.0
    %756 = vmatpush1.msra.mxu0 %v209
    %757 = vmatprep.subr.mxu0 0.0
    %758 = vmatpush1.msra.mxu0 %v208
    %759 = vmatprep.subr.mxu0 0.0
    %760 = vmatpush1.msra.mxu0 %v207
    %761 = vmatprep.subr.mxu0 0.0
    %762 = vmatpush1.msra.mxu0 %v206
    %763 = vmatprep.subr.mxu0 0.0
    %764 = vmatpush1.msra.mxu0 %v205
    %765 = vmatprep.subr.mxu0 0.0
    %766 = vmatpush1.msra.mxu0 %v204
    %767 = vmatprep.subr.mxu0 0.0
    %768 = vmatpush1.msra.mxu0 %v203
    %769 = vmatprep.subr.mxu0 0.0
    %770 = vmatpush1.msra.mxu0 %v202
    %771 = vmatprep.subr.mxu0 0.0
    %772 = vmatpush1.msra.mxu0 %v201
    %773 = vmatprep.subr.mxu0 0.0
    %774 = vmatpush1.msra.mxu0 %v200
    %775 = vmatprep.subr.mxu0 0.0
    %776 = vmatpush1.msra.mxu0 %v199
    %777 = vmatprep.subr.mxu0 0.0
    %778 = vmatpush1.msra.mxu0 %v198
    %779 = vmatprep.subr.mxu0 0.0
    %780 = vmatpush2.msra.mxu0 0.0
    %781 = vmatprep.subr.mxu0 0.0
    %782 = vmatpush2.msra.mxu0 0.0
    %783 = vmatprep.subr.mxu0 0.0
    %784 = vmatpush2.msra.mxu0 0.0
    %785 = vmatprep.subr.mxu0 0.0
    %786 = vmatpush2.msra.mxu0 0.0
    %787 = vmatprep.subr.mxu0 0.0
    %788 = vmatpush2.msra.mxu0 0.0
    %789 = vmatprep.subr.mxu0 0.0
    %790 = vmatpush2.msra.mxu0 0.0
    %791 = vmatprep.subr.mxu0 0.0
    %792 = vmatpush2.msra.mxu0 0.0
    %793 = vmatprep.subr.mxu0 0.0
    %794 = vmatpush2.msra.mxu0 0.0
    %795 = vmatprep.subr.mxu0 0.0
    %796 = vmatpush2.msra.mxu0 0.0
    %797 = vmatprep.subr.mxu0 0.0
    %798 = vmatpush2.msra.mxu0 0.0
    %799 = vmatprep.subr.mxu0 0.0
    %800 = vmatpush2.msra.mxu0 0.0
    %801 = vmatprep.subr.mxu0 0.0
    %802 = vmatpush2.msra.mxu0 0.0
    %803 = vmatprep.subr.mxu0 0.0
    %804 = vmatpush2.msra.mxu0 0.0
    %805 = vmatprep.subr.mxu0 0.0
    %806 = vmatpush2.msra.mxu0 0.0
    %807 = vmatprep.subr.mxu0 0.0
    %808 = vmatpush2.msra.mxu0 0.0
    %809 = vmatprep.subr.mxu0 0.0
    %810 = vmatpush2.msra.mxu0 0.0
    %811 = vmatprep.mubr.f32.mxu0 0.0
    %812 = vmatmul.mubr.f32.gmra.mxu0 %v742
    %v813 = vpop.f32.mrf.mxu0
    %v814 = vadd.f32 0.0, %v813
    %v815 = vpop.f32.mrf.mxu0
    %816 = vdwg.mxu0
    %v817 = vadd.f32 %v746, %v814
    %v818 = vtanh.pop %v817
    %s819 = scalar_lea.vmem [#allocation7], 56
    %820 = vst [vmem:[%s819] sm:$0xff] %v818
    %821 = vst [vmem:[#allocation2] sm:$0xff] %v818
    // Predicated region
    $region30: #{tpu_custom_call.1} parent=1 // pred_check
      _
    $region31: #{tpu_custom_call.1} parent=1 // pred_check_branch
      %823 = sbr.rel (0) target = $region33
    $region32: #{tpu_custom_call.1} parent=1 // pred_region
      %s825 = ssub.s32 1024, 1024
      %826 = vsyncadd [#allocation6], %s825
      %s827 = sshll.u32 [#allocation7], 4
      %s828 = int_to_ptr.vmem [resolvable:$true] %s827
      %833 = dma.vmem_to_hbm [thread:$0]  %s828, 1024, %s5, [#allocation6], 128, 128, 8
    $region33: #{tpu_custom_call.1} parent=1 // pred_fallthru
      _
    // Predicated region
    $region34: #{tpu_custom_call.1} parent=1 // pred_check
      _
    $region35: #{tpu_custom_call.1} parent=1 // pred_check_branch
      %835 = sbr.rel (0) target = $region37
    $region36: #{tpu_custom_call.1} parent=1 // pred_region
      %836 = dma.done [#allocation6], 1024
    $region37: #{tpu_custom_call.1} parent=1 // pred_fallthru
      _
    %837 = vsyncpa [#allocation5], 1
    %838 = vsyncpa [#allocation6], 1

</llo_original>
